<compile_context>
chip_gen: v6e
topology: v6e:2x2x1
jax: 0.10.0
libtpu: 0.0.40
codegen_flags: <defaults>
</compile_context>

<pallas_src>
import math
from functools import partial

import jax
import jax.numpy as jnp
from jax import lax
from jax.experimental import pallas as pl
from jax.experimental.pallas import tpu as pltpu


# ----------------------------------------------------------------------------
# Static geometry (CNN applied to 3x32x32 inputs, as in the original script).
# ----------------------------------------------------------------------------
H = W = 32
C_IN, C1, C2 = 3, 32, 64
K1 = 27                       # conv1 im2col contraction: 3*3*3
N_UV = 9                      # conv2 kernel taps
N_Q = 4                       # conv2 outputs that survive avgpool2 (top-left 2x2)
TAPSLAB = 2 * N_Q             # 8 rows per conv2-tap slab (2 images x 4 outputs)
GROUP = N_UV * TAPSLAB        # 72 rows per pool1-parity group (multiple of 8)
ROWS_PER_PAIR = 4 * GROUP     # 288 conv1 rows per image pair (144 per image)

_INV_SQRT2 = 1.0 / math.sqrt(2.0)


def _gelu(x):
    # exact erf-based GELU (matches torch.nn.functional.gelu default)
    return 0.5 * x * (1.0 + lax.erf(x * _INV_SQRT2))


# ----------------------------------------------------------------------------
# The fused Pallas kernel: one block of `ts` image pairs per grid step.
# ----------------------------------------------------------------------------
def _cnn_kernel(x_ref, w1_ref, b1_ref, w2_ref, b2_ref, o_ref):
    # x_ref : (ts*288, 27)  pre-ordered conv1 im2col rows (see _pack_input)
    # w1_ref: (27, 32)      conv1 weight, (tap, cin) fused into K
    # b1_ref: (1, 32)
    # w2_ref: (9, 32, 64)   conv2 weight, one (cin, cout) slab per tap
    # b2_ref: (1, 64)
    # o_ref : (ts, 128)     lanes = image_in_pair * 64 + channel
    ts = x_ref.shape[0] // ROWS_PER_PAIR

    # ---- conv1: ONE matmul, batch/space in M, taps+cin in K ------------------
    a1 = jnp.dot(x_ref[...], w1_ref[...], preferred_element_type=jnp.float32)
    a1 = _gelu(a1 + b1_ref[...])                       # (ts*288, 32), f32

    # ---- avgpool1: the 4 parity groups are aligned 72-row slabs -> 3 adds ----
    a1 = a1.reshape(ts, ROWS_PER_PAIR, C1)
    x2 = 0.25 * (a1[:, 0 * GROUP:1 * GROUP, :]
                 + a1[:, 1 * GROUP:2 * GROUP, :]
                 + a1[:, 2 * GROUP:3 * GROUP, :]
                 + a1[:, 3 * GROUP:4 * GROUP, :])      # (ts, 72, 32)
    x2 = x2.astype(w2_ref.dtype)

    # ---- conv2: 9 tap matmuls over aligned 8-row slabs, batch folded into M --
    acc2 = jnp.zeros((ts * TAPSLAB, C2), jnp.float32)
    for uv in range(N_UV):
        slab = x2[:, uv * TAPSLAB:(uv + 1) * TAPSLAB, :].reshape(ts * TAPSLAB, C1)
        acc2 = acc2 + jnp.dot(slab, w2_ref[uv], preferred_element_type=jnp.float32)
    a2 = _gelu(acc2 + b2_ref[...])                     # (ts*8, 64), f32

    # ---- avgpool2 + flatten: rows are (p*4 + q); average over q per image ----
    a2 = a2.reshape(ts, TAPSLAB, C2)
    out0 = a2[:, 0, :] + a2[:, 1, :] + a2[:, 2, :] + a2[:, 3, :]   # image p=0
    out1 = a2[:, 4, :] + a2[:, 5, :] + a2[:, 6, :] + a2[:, 7, :]   # image p=1
    o_ref[...] = 0.25 * jnp.concatenate([out0, out1], axis=-1)     # (ts, 128)


# ----------------------------------------------------------------------------
# Wrapper-side layout plumbing (one-time im2col / row reordering, XLA side).
# ----------------------------------------------------------------------------
def _pack_input(x_nchw, n_pairs_pad, dtype):
    """(B, 3, 32, 32) NCHW (B even) -> (n_pairs_pad*288, 27) im2col rows.

    Per image pair s, row = g*72 + uv*8 + p*4 + q with
      g  = pool1 2x2 parity cell (a, b)   -> summed by the in-kernel avgpool1
      uv = conv2 kernel tap (u, v)        -> aligned 8-row slab per tap
      p  = image within the pair, q = conv2 output position (2x2 kept by pool2)
    Row contents = 27-wide conv1 patch (r, t, cin) at conv1 output position
      (4*qh + 2*u + a, 4*qw + 2*v + b).
    """
    B = x_nchw.shape[0]
    xh = jnp.transpose(x_nchw, (0, 2, 3, 1))                       # (B, 32, 32, 3)
    cols = [xh[:, r:r + 20:2, t:t + 20:2, :]                       # (B, 10, 10, 3)
            for r in range(3) for t in range(3)]
    patches = jnp.stack(cols, axis=3).reshape(B, 10, 10, K1)       # (B, 10, 10, 27)

    blocks = []
    for a in range(2):
        for b in range(2):
            for u in range(3):
                for v in range(3):
                    oh0, ow0 = 2 * u + a, 2 * v + b
                    blk = patches[:, oh0:oh0 + 5:4, ow0:ow0 + 5:4, :]   # (B, 2, 2, 27)
                    blocks.append(blk.reshape(B, N_Q, K1))
    xg = jnp.stack(blocks, axis=1)                                 # (B, 36, 4, 27)
    xg = xg.reshape(B // 2, 2, 4 * N_UV, N_Q, K1)                  # (s, p, g*9+uv, q, k)
    xg = jnp.transpose(xg, (0, 2, 1, 3, 4))                        # (s, g*9+uv, p, q, k)
    xg = xg.reshape(B // 2, ROWS_PER_PAIR, K1)
    if n_pairs_pad > B // 2:
        xg = jnp.pad(xg, ((0, n_pairs_pad - B // 2), (0, 0), (0, 0)))
    return xg.reshape(n_pairs_pad * ROWS_PER_PAIR, K1).astype(dtype)


def _pack_weights(params, dtype):
    # PyTorch layout (Cout, Cin, kh, kw) -> (tap, cin) fused / per-tap slabs.
    w1 = jnp.transpose(params["w1"], (2, 3, 1, 0)).reshape(K1, C1).astype(dtype)
    w2 = jnp.transpose(params["w2"], (2, 3, 1, 0)).reshape(N_UV, C1, C2).astype(dtype)
    b1 = params["b1"].reshape(1, C1).astype(jnp.float32)
    b2 = params["b2"].reshape(1, C2).astype(jnp.float32)
    return w1, b1, w2, b2


def cnn_forward(x_nchw, params, *, block_pairs=16, use_bf16=False):
    """Forward pass of the CNN.  block_pairs = image pairs per grid step."""
    B = x_nchw.shape[0]
    cdt = jnp.bfloat16 if use_bf16 else jnp.float32

    n_pairs = (B + 1) // 2
    ts = max(1, min(block_pairs, n_pairs))
    if ts < n_pairs:                 # multi-step grid: keep the block 8-aligned
        ts = max(8, (ts // 8) * 8)
    n_pairs_pad = ((n_pairs + ts - 1) // ts) * ts
    b_pad = 2 * n_pairs_pad
    if b_pad > B:
        x_nchw = jnp.pad(x_nchw, ((0, b_pad - B), (0, 0), (0, 0), (0, 0)))

    xp = _pack_input(x_nchw, n_pairs_pad, cdt)
    w1, b1, w2, b2 = _pack_weights(params, cdt)

    block_rows = ts * ROWS_PER_PAIR
    out = pl.pallas_call(
        _cnn_kernel,
        out_shape=jax.ShapeDtypeStruct((n_pairs_pad, 2 * C2), jnp.float32),
        grid=(n_pairs_pad // ts,),
        in_specs=[
            pl.BlockSpec((block_rows, K1), lambda i: (i, 0)),
            pl.BlockSpec((K1, C1), lambda i: (0, 0)),
            pl.BlockSpec((1, C1), lambda i: (0, 0)),
            pl.BlockSpec((N_UV, C1, C2), lambda i: (0, 0, 0)),
            pl.BlockSpec((1, C2), lambda i: (0, 0)),
        ],
        out_specs=pl.BlockSpec((ts, 2 * C2), lambda i: (i, 0)),
        compiler_params=pltpu.CompilerParams(
            dimension_semantics=("parallel",),
            vmem_limit_bytes=64 * 1024 * 1024),
    )(xp, w1, b1, w2, b2)

    return out.reshape(b_pad, C2)[:B]


# ----------------------------------------------------------------------------
# Pure-JAX reference (numerical check) + params + main.
# ----------------------------------------------------------------------------
def _reference_forward(x_nchw, params):
    def gelu(v):
        return 0.5 * v * (1.0 + lax.erf(v * _INV_SQRT2))

    y = lax.conv_general_dilated(x_nchw, params["w1"], (2, 2), "VALID",
                                 dimension_numbers=("NCHW", "OIHW", "NCHW"))
    y = gelu(y + params["b1"].reshape(1, -1, 1, 1))
    y = lax.reduce_window(y, 0.0, lax.add, (1, 1, 2, 2), (1, 1, 2, 2), "VALID") * 0.25
    y = lax.conv_general_dilated(y, params["w2"], (2, 2), "VALID",
                                 dimension_numbers=("NCHW", "OIHW", "NCHW"))
    y = gelu(y + params["b2"].reshape(1, -1, 1, 1))
    y = lax.reduce_window(y, 0.0, lax.add, (1, 1, 2, 2), (1, 1, 2, 2), "VALID") * 0.25
    return y.reshape(y.shape[0], -1)


def init_params(key):
    k1, k2, k3, k4 = jax.random.split(key, 4)
    w1 = jax.random.normal(k1, (C1, C_IN, 3, 3), jnp.float32) * (1.0 / math.sqrt(C_IN * 9))
    b1 = jax.random.normal(k2, (C1,), jnp.float32) * 0.01
    w2 = jax.random.normal(k3, (C2, C1, 3, 3), jnp.float32) * (1.0 / math.sqrt(C1 * 9))
    b2 = jax.random.normal(k4, (C2,), jnp.float32) * 0.01
    return {"w1": w1, "b1": b1, "w2": w2, "b2": b2}


if __name__ == "__main__":
    key = jax.random.PRNGKey(0)
    pkey, xkey = jax.random.split(key)
    params = init_params(pkey)

    x = jax.random.normal(xkey, (2, C_IN, H, W), jnp.float32)

    ref = jax.block_until_ready(_reference_forward(x, params))

    # f32 path (default): numerics match the PyTorch module.
    out = jax.jit(partial(cnn_forward, params=params))(x)
    out = jax.block_until_ready(out)
    assert out.shape == (2, C2), out.shape
    max_err = float(jnp.max(jnp.abs(out - ref)))
    assert max_err < 1e-3, f"f32 mismatch vs reference: {max_err}"

    # bf16-operand fast path (flagged): f32 accumulation, reduced-precision MACs.
    out_bf16 = jax.jit(partial(cnn_forward, params=params, use_bf16=True))(x)
    out_bf16 = jax.block_until_ready(out_bf16)
    max_err_bf16 = float(jnp.max(jnp.abs(out_bf16 - ref)))
    assert max_err_bf16 < 1e-1, f"bf16 mismatch vs reference: {max_err_bf16}"

    print("KERNEL_OK")
</pallas_src>

<mosaic_0001>
module attributes {stable_mosaic.version = 11 : i64} {
  func.func @_cnn_kernel(%arg0: i32, %arg1: memref<288x27xf32, #tpu.memory_space<vmem>>, %arg2: memref<27x32xf32, #tpu.memory_space<vmem>>, %arg3: memref<1x32xf32, #tpu.memory_space<vmem>>, %arg4: memref<9x32x64xf32, #tpu.memory_space<vmem>>, %arg5: memref<1x64xf32, #tpu.memory_space<vmem>>, %arg6: memref<1x128xf32, #tpu.memory_space<vmem>>) attributes {dimension_semantics = [#tpu.dimension_semantics<parallel>], iteration_bounds = array<i64: 1>, scalar_prefetch = 0 : i64, scratch_operands = 0 : i64, tpu.core_type = #tpu.core_type<tc>, window_params = [{transform_indices = @transform_0, window_bounds = array<i64: 288, 27>}, {pipeline_mode = #tpu.pipeline_mode<synchronous>, transform_indices = @transform_1, window_bounds = array<i64: 27, 32>}, {pipeline_mode = #tpu.pipeline_mode<synchronous>, transform_indices = @transform_2, window_bounds = array<i64: 1, 32>}, {pipeline_mode = #tpu.pipeline_mode<synchronous>, transform_indices = @transform_3, window_bounds = array<i64: 9, 32, 64>}, {pipeline_mode = #tpu.pipeline_mode<synchronous>, transform_indices = @transform_4, window_bounds = array<i64: 1, 64>}, {transform_indices = @transform_5, window_bounds = array<i64: 1, 128>}]} {
    %c0 = arith.constant 0 : index
    %c0_0 = arith.constant 0 : index
    %0 = vector.load %arg1[%c0, %c0_0] : memref<288x27xf32, #tpu.memory_space<vmem>>, vector<288x27xf32>
    %c0_1 = arith.constant 0 : index
    %c0_2 = arith.constant 0 : index
    %1 = vector.load %arg2[%c0_1, %c0_2] : memref<27x32xf32, #tpu.memory_space<vmem>>, vector<27x32xf32>
    %cst = arith.constant dense<0.000000e+00> : vector<288x32xf32>
    %2 = tpu.matmul %0, %1, %cst {dimension_numbers = #tpu.dot_dimension_numbers<[1], [0], [0], [1], [0, 0, 1, 1], [], []>} : vector<288x27xf32>, vector<27x32xf32>, vector<288x32xf32> -> vector<288x32xf32>
    %c0_3 = arith.constant 0 : index
    %c0_4 = arith.constant 0 : index
    %3 = vector.load %arg3[%c0_3, %c0_4] : memref<1x32xf32, #tpu.memory_space<vmem>>, vector<1x32xf32>
    %4 = vector.broadcast %3 : vector<1x32xf32> to vector<288x32xf32>
    %5 = arith.addf %2, %4 : vector<288x32xf32>
    %cst_5 = arith.constant 5.000000e-01 : f32
    %6 = vector.broadcast %cst_5 : f32 to vector<288x32xf32>
    %7 = arith.mulf %6, %5 : vector<288x32xf32>
    %cst_6 = arith.constant 0.707106769 : f32
    %8 = vector.broadcast %cst_6 : f32 to vector<288x32xf32>
    %9 = arith.mulf %5, %8 : vector<288x32xf32>
    %10 = math.erf %9 : vector<288x32xf32>
    %cst_7 = arith.constant 1.000000e+00 : f32
    %11 = vector.broadcast %cst_7 : f32 to vector<288x32xf32>
    %12 = arith.addf %11, %10 : vector<288x32xf32>
    %13 = arith.mulf %7, %12 : vector<288x32xf32>
    %14 = vector.shape_cast %13 : vector<288x32xf32> to vector<1x288x32xf32>
    %15 = vector.extract_strided_slice %14 {offsets = [0, 0, 0], sizes = [1, 72, 32], strides = [1, 1, 1]} : vector<1x288x32xf32> to vector<1x72x32xf32>
    %16 = vector.extract_strided_slice %14 {offsets = [0, 72, 0], sizes = [1, 72, 32], strides = [1, 1, 1]} : vector<1x288x32xf32> to vector<1x72x32xf32>
    %17 = arith.addf %15, %16 : vector<1x72x32xf32>
    %18 = vector.extract_strided_slice %14 {offsets = [0, 144, 0], sizes = [1, 72, 32], strides = [1, 1, 1]} : vector<1x288x32xf32> to vector<1x72x32xf32>
    %19 = arith.addf %17, %18 : vector<1x72x32xf32>
    %20 = vector.extract_strided_slice %14 {offsets = [0, 216, 0], sizes = [1, 72, 32], strides = [1, 1, 1]} : vector<1x288x32xf32> to vector<1x72x32xf32>
    %21 = arith.addf %19, %20 : vector<1x72x32xf32>
    %cst_8 = arith.constant 2.500000e-01 : f32
    %22 = vector.broadcast %cst_8 : f32 to vector<1x72x32xf32>
    %23 = arith.mulf %22, %21 : vector<1x72x32xf32>
    %cst_9 = arith.constant 0.000000e+00 : f32
    %24 = vector.broadcast %cst_9 : f32 to vector<8x64xf32>
    %25 = vector.extract_strided_slice %23 {offsets = [0, 0, 0], sizes = [1, 8, 32], strides = [1, 1, 1]} : vector<1x72x32xf32> to vector<1x8x32xf32>
    %26 = vector.shape_cast %25 : vector<1x8x32xf32> to vector<8x32xf32>
    %c0_10 = arith.constant 0 : index
    %c0_11 = arith.constant 0 : index
    %c0_12 = arith.constant 0 : index
    %27 = vector.load %arg4[%c0_10, %c0_11, %c0_12] : memref<9x32x64xf32, #tpu.memory_space<vmem>>, vector<1x32x64xf32>
    %28 = vector.shape_cast %27 : vector<1x32x64xf32> to vector<32x64xf32>
    %cst_13 = arith.constant dense<0.000000e+00> : vector<8x64xf32>
    %29 = tpu.matmul %26, %28, %cst_13 {dimension_numbers = #tpu.dot_dimension_numbers<[1], [0], [0], [1], [0, 0, 1, 1], [], []>} : vector<8x32xf32>, vector<32x64xf32>, vector<8x64xf32> -> vector<8x64xf32>
    %30 = arith.addf %24, %29 : vector<8x64xf32>
    %31 = vector.extract_strided_slice %23 {offsets = [0, 8, 0], sizes = [1, 8, 32], strides = [1, 1, 1]} : vector<1x72x32xf32> to vector<1x8x32xf32>
    %32 = vector.shape_cast %31 : vector<1x8x32xf32> to vector<8x32xf32>
    %c1 = arith.constant 1 : index
    %c0_14 = arith.constant 0 : index
    %c0_15 = arith.constant 0 : index
    %33 = vector.load %arg4[%c1, %c0_14, %c0_15] : memref<9x32x64xf32, #tpu.memory_space<vmem>>, vector<1x32x64xf32>
    %34 = vector.shape_cast %33 : vector<1x32x64xf32> to vector<32x64xf32>
    %cst_16 = arith.constant dense<0.000000e+00> : vector<8x64xf32>
    %35 = tpu.matmul %32, %34, %cst_16 {dimension_numbers = #tpu.dot_dimension_numbers<[1], [0], [0], [1], [0, 0, 1, 1], [], []>} : vector<8x32xf32>, vector<32x64xf32>, vector<8x64xf32> -> vector<8x64xf32>
    %36 = arith.addf %30, %35 : vector<8x64xf32>
    %37 = vector.extract_strided_slice %23 {offsets = [0, 16, 0], sizes = [1, 8, 32], strides = [1, 1, 1]} : vector<1x72x32xf32> to vector<1x8x32xf32>
    %38 = vector.shape_cast %37 : vector<1x8x32xf32> to vector<8x32xf32>
    %c2 = arith.constant 2 : index
    %c0_17 = arith.constant 0 : index
    %c0_18 = arith.constant 0 : index
    %39 = vector.load %arg4[%c2, %c0_17, %c0_18] : memref<9x32x64xf32, #tpu.memory_space<vmem>>, vector<1x32x64xf32>
    %40 = vector.shape_cast %39 : vector<1x32x64xf32> to vector<32x64xf32>
    %cst_19 = arith.constant dense<0.000000e+00> : vector<8x64xf32>
    %41 = tpu.matmul %38, %40, %cst_19 {dimension_numbers = #tpu.dot_dimension_numbers<[1], [0], [0], [1], [0, 0, 1, 1], [], []>} : vector<8x32xf32>, vector<32x64xf32>, vector<8x64xf32> -> vector<8x64xf32>
    %42 = arith.addf %36, %41 : vector<8x64xf32>
    %43 = vector.extract_strided_slice %23 {offsets = [0, 24, 0], sizes = [1, 8, 32], strides = [1, 1, 1]} : vector<1x72x32xf32> to vector<1x8x32xf32>
    %44 = vector.shape_cast %43 : vector<1x8x32xf32> to vector<8x32xf32>
    %c3 = arith.constant 3 : index
    %c0_20 = arith.constant 0 : index
    %c0_21 = arith.constant 0 : index
    %45 = vector.load %arg4[%c3, %c0_20, %c0_21] : memref<9x32x64xf32, #tpu.memory_space<vmem>>, vector<1x32x64xf32>
    %46 = vector.shape_cast %45 : vector<1x32x64xf32> to vector<32x64xf32>
    %cst_22 = arith.constant dense<0.000000e+00> : vector<8x64xf32>
    %47 = tpu.matmul %44, %46, %cst_22 {dimension_numbers = #tpu.dot_dimension_numbers<[1], [0], [0], [1], [0, 0, 1, 1], [], []>} : vector<8x32xf32>, vector<32x64xf32>, vector<8x64xf32> -> vector<8x64xf32>
    %48 = arith.addf %42, %47 : vector<8x64xf32>
    %49 = vector.extract_strided_slice %23 {offsets = [0, 32, 0], sizes = [1, 8, 32], strides = [1, 1, 1]} : vector<1x72x32xf32> to vector<1x8x32xf32>
    %50 = vector.shape_cast %49 : vector<1x8x32xf32> to vector<8x32xf32>
    %c4 = arith.constant 4 : index
    %c0_23 = arith.constant 0 : index
    %c0_24 = arith.constant 0 : index
    %51 = vector.load %arg4[%c4, %c0_23, %c0_24] : memref<9x32x64xf32, #tpu.memory_space<vmem>>, vector<1x32x64xf32>
    %52 = vector.shape_cast %51 : vector<1x32x64xf32> to vector<32x64xf32>
    %cst_25 = arith.constant dense<0.000000e+00> : vector<8x64xf32>
    %53 = tpu.matmul %50, %52, %cst_25 {dimension_numbers = #tpu.dot_dimension_numbers<[1], [0], [0], [1], [0, 0, 1, 1], [], []>} : vector<8x32xf32>, vector<32x64xf32>, vector<8x64xf32> -> vector<8x64xf32>
    %54 = arith.addf %48, %53 : vector<8x64xf32>
    %55 = vector.extract_strided_slice %23 {offsets = [0, 40, 0], sizes = [1, 8, 32], strides = [1, 1, 1]} : vector<1x72x32xf32> to vector<1x8x32xf32>
    %56 = vector.shape_cast %55 : vector<1x8x32xf32> to vector<8x32xf32>
    %c5 = arith.constant 5 : index
    %c0_26 = arith.constant 0 : index
    %c0_27 = arith.constant 0 : index
    %57 = vector.load %arg4[%c5, %c0_26, %c0_27] : memref<9x32x64xf32, #tpu.memory_space<vmem>>, vector<1x32x64xf32>
    %58 = vector.shape_cast %57 : vector<1x32x64xf32> to vector<32x64xf32>
    %cst_28 = arith.constant dense<0.000000e+00> : vector<8x64xf32>
    %59 = tpu.matmul %56, %58, %cst_28 {dimension_numbers = #tpu.dot_dimension_numbers<[1], [0], [0], [1], [0, 0, 1, 1], [], []>} : vector<8x32xf32>, vector<32x64xf32>, vector<8x64xf32> -> vector<8x64xf32>
    %60 = arith.addf %54, %59 : vector<8x64xf32>
    %61 = vector.extract_strided_slice %23 {offsets = [0, 48, 0], sizes = [1, 8, 32], strides = [1, 1, 1]} : vector<1x72x32xf32> to vector<1x8x32xf32>
    %62 = vector.shape_cast %61 : vector<1x8x32xf32> to vector<8x32xf32>
    %c6 = arith.constant 6 : index
    %c0_29 = arith.constant 0 : index
    %c0_30 = arith.constant 0 : index
    %63 = vector.load %arg4[%c6, %c0_29, %c0_30] : memref<9x32x64xf32, #tpu.memory_space<vmem>>, vector<1x32x64xf32>
    %64 = vector.shape_cast %63 : vector<1x32x64xf32> to vector<32x64xf32>
    %cst_31 = arith.constant dense<0.000000e+00> : vector<8x64xf32>
    %65 = tpu.matmul %62, %64, %cst_31 {dimension_numbers = #tpu.dot_dimension_numbers<[1], [0], [0], [1], [0, 0, 1, 1], [], []>} : vector<8x32xf32>, vector<32x64xf32>, vector<8x64xf32> -> vector<8x64xf32>
    %66 = arith.addf %60, %65 : vector<8x64xf32>
    %67 = vector.extract_strided_slice %23 {offsets = [0, 56, 0], sizes = [1, 8, 32], strides = [1, 1, 1]} : vector<1x72x32xf32> to vector<1x8x32xf32>
    %68 = vector.shape_cast %67 : vector<1x8x32xf32> to vector<8x32xf32>
    %c7 = arith.constant 7 : index
    %c0_32 = arith.constant 0 : index
    %c0_33 = arith.constant 0 : index
    %69 = vector.load %arg4[%c7, %c0_32, %c0_33] : memref<9x32x64xf32, #tpu.memory_space<vmem>>, vector<1x32x64xf32>
    %70 = vector.shape_cast %69 : vector<1x32x64xf32> to vector<32x64xf32>
    %cst_34 = arith.constant dense<0.000000e+00> : vector<8x64xf32>
    %71 = tpu.matmul %68, %70, %cst_34 {dimension_numbers = #tpu.dot_dimension_numbers<[1], [0], [0], [1], [0, 0, 1, 1], [], []>} : vector<8x32xf32>, vector<32x64xf32>, vector<8x64xf32> -> vector<8x64xf32>
    %72 = arith.addf %66, %71 : vector<8x64xf32>
    %73 = vector.extract_strided_slice %23 {offsets = [0, 64, 0], sizes = [1, 8, 32], strides = [1, 1, 1]} : vector<1x72x32xf32> to vector<1x8x32xf32>
    %74 = vector.shape_cast %73 : vector<1x8x32xf32> to vector<8x32xf32>
    %c8 = arith.constant 8 : index
    %c0_35 = arith.constant 0 : index
    %c0_36 = arith.constant 0 : index
    %75 = vector.load %arg4[%c8, %c0_35, %c0_36] : memref<9x32x64xf32, #tpu.memory_space<vmem>>, vector<1x32x64xf32>
    %76 = vector.shape_cast %75 : vector<1x32x64xf32> to vector<32x64xf32>
    %cst_37 = arith.constant dense<0.000000e+00> : vector<8x64xf32>
    %77 = tpu.matmul %74, %76, %cst_37 {dimension_numbers = #tpu.dot_dimension_numbers<[1], [0], [0], [1], [0, 0, 1, 1], [], []>} : vector<8x32xf32>, vector<32x64xf32>, vector<8x64xf32> -> vector<8x64xf32>
    %78 = arith.addf %72, %77 : vector<8x64xf32>
    %c0_38 = arith.constant 0 : index
    %c0_39 = arith.constant 0 : index
    %79 = vector.load %arg5[%c0_38, %c0_39] : memref<1x64xf32, #tpu.memory_space<vmem>>, vector<1x64xf32>
    %80 = vector.broadcast %79 : vector<1x64xf32> to vector<8x64xf32>
    %81 = arith.addf %78, %80 : vector<8x64xf32>
    %cst_40 = arith.constant 5.000000e-01 : f32
    %82 = vector.broadcast %cst_40 : f32 to vector<8x64xf32>
    %83 = arith.mulf %82, %81 : vector<8x64xf32>
    %cst_41 = arith.constant 0.707106769 : f32
    %84 = vector.broadcast %cst_41 : f32 to vector<8x64xf32>
    %85 = arith.mulf %81, %84 : vector<8x64xf32>
    %86 = math.erf %85 : vector<8x64xf32>
    %cst_42 = arith.constant 1.000000e+00 : f32
    %87 = vector.broadcast %cst_42 : f32 to vector<8x64xf32>
    %88 = arith.addf %87, %86 : vector<8x64xf32>
    %89 = arith.mulf %83, %88 : vector<8x64xf32>
    %90 = vector.shape_cast %89 : vector<8x64xf32> to vector<1x8x64xf32>
    %91 = vector.extract_strided_slice %90 {offsets = [0, 0, 0], sizes = [1, 1, 64], strides = [1, 1, 1]} : vector<1x8x64xf32> to vector<1x1x64xf32>
    %92 = vector.shape_cast %91 : vector<1x1x64xf32> to vector<1x64xf32>
    %93 = vector.extract_strided_slice %90 {offsets = [0, 1, 0], sizes = [1, 1, 64], strides = [1, 1, 1]} : vector<1x8x64xf32> to vector<1x1x64xf32>
    %94 = vector.shape_cast %93 : vector<1x1x64xf32> to vector<1x64xf32>
    %95 = arith.addf %92, %94 : vector<1x64xf32>
    %96 = vector.extract_strided_slice %90 {offsets = [0, 2, 0], sizes = [1, 1, 64], strides = [1, 1, 1]} : vector<1x8x64xf32> to vector<1x1x64xf32>
    %97 = vector.shape_cast %96 : vector<1x1x64xf32> to vector<1x64xf32>
    %98 = arith.addf %95, %97 : vector<1x64xf32>
    %99 = vector.extract_strided_slice %90 {offsets = [0, 3, 0], sizes = [1, 1, 64], strides = [1, 1, 1]} : vector<1x8x64xf32> to vector<1x1x64xf32>
    %100 = vector.shape_cast %99 : vector<1x1x64xf32> to vector<1x64xf32>
    %101 = arith.addf %98, %100 : vector<1x64xf32>
    %102 = vector.extract_strided_slice %90 {offsets = [0, 4, 0], sizes = [1, 1, 64], strides = [1, 1, 1]} : vector<1x8x64xf32> to vector<1x1x64xf32>
    %103 = vector.shape_cast %102 : vector<1x1x64xf32> to vector<1x64xf32>
    %104 = vector.extract_strided_slice %90 {offsets = [0, 5, 0], sizes = [1, 1, 64], strides = [1, 1, 1]} : vector<1x8x64xf32> to vector<1x1x64xf32>
    %105 = vector.shape_cast %104 : vector<1x1x64xf32> to vector<1x64xf32>
    %106 = arith.addf %103, %105 : vector<1x64xf32>
    %107 = vector.extract_strided_slice %90 {offsets = [0, 6, 0], sizes = [1, 1, 64], strides = [1, 1, 1]} : vector<1x8x64xf32> to vector<1x1x64xf32>
    %108 = vector.shape_cast %107 : vector<1x1x64xf32> to vector<1x64xf32>
    %109 = arith.addf %106, %108 : vector<1x64xf32>
    %110 = vector.extract_strided_slice %90 {offsets = [0, 7, 0], sizes = [1, 1, 64], strides = [1, 1, 1]} : vector<1x8x64xf32> to vector<1x1x64xf32>
    %111 = vector.shape_cast %110 : vector<1x1x64xf32> to vector<1x64xf32>
    %112 = arith.addf %109, %111 : vector<1x64xf32>
    %113 = tpu.concatenate %101, %112 in 1 : vector<1x64xf32>, vector<1x64xf32> -> vector<1x128xf32>
    %cst_43 = arith.constant 2.500000e-01 : f32
    %114 = vector.broadcast %cst_43 : f32 to vector<1x128xf32>
    %115 = arith.mulf %114, %113 : vector<1x128xf32>
    %c0_44 = arith.constant 0 : index
    %c0_45 = arith.constant 0 : index
    %116 = vector.load %arg6[%c0_44, %c0_45] : memref<1x128xf32, #tpu.memory_space<vmem>>, vector<1x128xf32>
    tpu.vector_store %arg6[%c0_44, %c0_45], %115 {strides = array<i32>} : memref<1x128xf32, #tpu.memory_space<vmem>>, vector<1x128xf32>,
    return
  }
  func.func @transform_0(%arg0: i32) -> (i32, i32) {
    %c0_i32 = arith.constant 0 : i32
    %c0_i32_0 = arith.constant 0 : i32
    return %arg0, %c0_i32 : i32, i32
  }
  func.func @transform_1(%arg0: i32) -> (i32, i32) {
    %c0_i32 = arith.constant 0 : i32
    %c0_i32_0 = arith.constant 0 : i32
    %c0_i32_1 = arith.constant 0 : i32
    return %c0_i32, %c0_i32_0 : i32, i32
  }
  func.func @transform_2(%arg0: i32) -> (i32, i32) {
    %c0_i32 = arith.constant 0 : i32
    %c0_i32_0 = arith.constant 0 : i32
    %c0_i32_1 = arith.constant 0 : i32
    return %c0_i32, %c0_i32_0 : i32, i32
  }
  func.func @transform_3(%arg0: i32) -> (i32, i32, i32) {
    %c0_i32 = arith.constant 0 : i32
    %c0_i32_0 = arith.constant 0 : i32
    %c0_i32_1 = arith.constant 0 : i32
    %c0_i32_2 = arith.constant 0 : i32
    return %c0_i32, %c0_i32_0, %c0_i32_1 : i32, i32, i32
  }
  func.func @transform_4(%arg0: i32) -> (i32, i32) {
    %c0_i32 = arith.constant 0 : i32
    %c0_i32_0 = arith.constant 0 : i32
    %c0_i32_1 = arith.constant 0 : i32
    return %c0_i32, %c0_i32_0 : i32, i32
  }
  func.func @transform_5(%arg0: i32) -> (i32, i32) {
    %c0_i32 = arith.constant 0 : i32
    %c0_i32_0 = arith.constant 0 : i32
    return %arg0, %c0_i32 : i32, i32
  }
}

</mosaic_0001>

<llo_original>
// kernel: cnn_forward.1
$region0: #{cnn_forward.1}
  #allocation0 [shape = 'u32[]', space=smem, size = 0x4, offset = 0x4, fixed_abs, tag = 'smem constant byte address 0x4 - core index']
  #allocation1 [shape = 'u32[144,128]{1,0:T(1,128)}', space=vmem, size = 0x12000, scoped, tag = 'internal scratch']
  %s0 = inlined_call_operand.vmem [shape: f32[288,27], index: 0, kind: input, shape index: {}]
  %s1 = inlined_call_operand.vmem [shape: f32[27,32], index: 1, kind: input, shape index: {}]
  %s2 = inlined_call_operand.vmem [shape: f32[1,32], index: 2, kind: input, shape index: {}]
  %s3 = inlined_call_operand.vmem [shape: f32[9,32,64], index: 3, kind: input, shape index: {}]
  %s4 = inlined_call_operand.vmem [shape: f32[1,64], index: 4, kind: input, shape index: {}]
  %s5 = inlined_call_operand.vmem [shape: f32[1,128], index: 5, kind: output, shape index: {}]
  %s6 = sld [smem:[#allocation0]]
  $region30: #{cnn_forward.1} parent=0
    _
  %s8 = ssub.s32 1, %s6
  %s9 = scalar_select 0, %s8, %s6
  // Predicated region
  $region2: #{cnn_forward.1} parent=0 // pred_check
    _
  $region3: #{cnn_forward.1} parent=0 // pred_check_branch
    %11 = sbr.rel (0) target = $region5
  $region4: #{cnn_forward.1} parent=0 // pred_region
    _
  $region5: #{cnn_forward.1} parent=0 // pred_fallthru
    _
  // Predicated region
  $region6: #{cnn_forward.1} parent=0 // pred_check
    _
  $region7: #{cnn_forward.1} parent=0 // pred_check_branch
    %13 = sbr.rel (0) target = $region9
  $region8: #{cnn_forward.1} parent=0 // pred_region
    _
  $region9: #{cnn_forward.1} parent=0 // pred_fallthru
    _
  // Predicated region
  $region10: #{cnn_forward.1} parent=0 // pred_check
    _
  $region11: #{cnn_forward.1} parent=0 // pred_check_branch
    %15 = sbr.rel (0) target = $region13
  $region12: #{cnn_forward.1} parent=0 // pred_region
    _
  $region13: #{cnn_forward.1} parent=0 // pred_fallthru
    _
  // Predicated region
  $region14: #{cnn_forward.1} parent=0 // pred_check
    _
  $region15: #{cnn_forward.1} parent=0 // pred_check_branch
    %17 = sbr.rel (0) target = $region17
  $region16: #{cnn_forward.1} parent=0 // pred_region
    _
  $region17: #{cnn_forward.1} parent=0 // pred_fallthru
    _
  // Predicated region
  $region18: #{cnn_forward.1} parent=0 // pred_check
    _
  $region19: #{cnn_forward.1} parent=0 // pred_check_branch
    %19 = sbr.rel (0) target = $region21
  $region20: #{cnn_forward.1} parent=0 // pred_region
    _
  $region21: #{cnn_forward.1} parent=0 // pred_fallthru
    _
  %v20 = vld [vmem:[%s0] sm:$0xff]
  %v21 = vld [vmem:[%s0 + $0x8] sm:$0xff]
  %v22 = vld [vmem:[%s0 + $0x10] sm:$0xff]
  %v23 = vld [vmem:[%s0 + $0x18] sm:$0xff]
  %v24 = vld [vmem:[%s0 + $0x20] sm:$0xff]
  %v25 = vld [vmem:[%s0 + $0x28] sm:$0xff]
  %v26 = vld [vmem:[%s0 + $0x30] sm:$0xff]
  %v27 = vld [vmem:[%s0 + $0x38] sm:$0xff]
  %v28 = vld [vmem:[%s0 + $0x40] sm:$0xff]
  %v29 = vld [vmem:[%s0 + $0x48] sm:$0xff]
  %v30 = vld [vmem:[%s0 + $0x50] sm:$0xff]
  %v31 = vld [vmem:[%s0 + $0x58] sm:$0xff]
  %v32 = vld [vmem:[%s0 + $0x60] sm:$0xff]
  %v33 = vld [vmem:[%s0 + $0x68] sm:$0xff]
  %v34 = vld [vmem:[%s0 + $0x70] sm:$0xff]
  %v35 = vld [vmem:[%s0 + $0x78] sm:$0xff]
  %v36 = vld [vmem:[%s0 + $0x80] sm:$0xff]
  %v37 = vld [vmem:[%s0 + $0x88] sm:$0xff]
  %v38 = vld [vmem:[%s0 + $0x90] sm:$0xff]
  %v39 = vld [vmem:[%s0 + $0x98] sm:$0xff]
  %v40 = vld [vmem:[%s0 + $0xa0] sm:$0xff]
  %v41 = vld [vmem:[%s0 + $0xa8] sm:$0xff]
  %v42 = vld [vmem:[%s0 + $0xb0] sm:$0xff]
  %v43 = vld [vmem:[%s0 + $0xb8] sm:$0xff]
  %v44 = vld [vmem:[%s0 + $0xc0] sm:$0xff]
  %v45 = vld [vmem:[%s0 + $0xc8] sm:$0xff]
  %v46 = vld [vmem:[%s0 + $0xd0] sm:$0xff]
  %v47 = vld [vmem:[%s0 + $0xd8] sm:$0xff]
  %v48 = vld [vmem:[%s0 + $0xe0] sm:$0xff]
  %v49 = vld [vmem:[%s0 + $0xe8] sm:$0xff]
  %v50 = vld [vmem:[%s0 + $0xf0] sm:$0xff]
  %v51 = vld [vmem:[%s0 + $0xf8] sm:$0xff]
  %v52 = vld [vmem:[%s0 + $0x100] sm:$0xff]
  %v53 = vld [vmem:[%s0 + $0x108] sm:$0xff]
  %v54 = vld [vmem:[%s0 + $0x110] sm:$0xff]
  %v55 = vld [vmem:[%s0 + $0x118] sm:$0xff]
  %v56 = vld [vmem:[%s1] sm:$0xff]
  %v57 = vld [vmem:[%s1 + $0x8] sm:$0xff]
  %v58 = vld [vmem:[%s1 + $0x10] sm:$0xff]
  %v59 = vld [vmem:[%s1 + $0x18] sm:$0x7]
  %v60 = vld [vmem:[%s2] sm:$0x1]
  %v62 = vlaneseq
  %v63 = vshrl.u32 %v62, 7
  %v64 = vsub.s32 0, %v63
  %v65 = vrot.slane %v60, %v64
  %vm67 = vcmask 220160
  %v69 = vsel %vm67, %v20, 0
  %v72 = vsel %vm67, %v21, 0
  %v75 = vsel %vm67, %v22, 0
  %v78 = vsel %vm67, %v23, 0
  %v81 = vsel %vm67, %v24, 0
  %v84 = vsel %vm67, %v25, 0
  %v87 = vsel %vm67, %v26, 0
  %v90 = vsel %vm67, %v27, 0
  %v93 = vsel %vm67, %v28, 0
  %v96 = vsel %vm67, %v29, 0
  %v99 = vsel %vm67, %v30, 0
  %v102 = vsel %vm67, %v31, 0
  %v105 = vsel %vm67, %v32, 0
  %v108 = vsel %vm67, %v33, 0
  %v111 = vsel %vm67, %v34, 0
  %v114 = vsel %vm67, %v35, 0
  %v117 = vsel %vm67, %v36, 0
  %v120 = vsel %vm67, %v37, 0
  %v123 = vsel %vm67, %v38, 0
  %v126 = vsel %vm67, %v39, 0
  %v129 = vsel %vm67, %v40, 0
  %v132 = vsel %vm67, %v41, 0
  %v135 = vsel %vm67, %v42, 0
  %v138 = vsel %vm67, %v43, 0
  %v141 = vsel %vm67, %v44, 0
  %v144 = vsel %vm67, %v45, 0
  %v147 = vsel %vm67, %v46, 0
  %v150 = vsel %vm67, %v47, 0
  %v153 = vsel %vm67, %v48, 0
  %v156 = vsel %vm67, %v49, 0
  %v159 = vsel %vm67, %v50, 0
  %v162 = vsel %vm67, %v51, 0
  %v165 = vsel %vm67, %v52, 0
  %v168 = vsel %vm67, %v53, 0
  %v171 = vsel %vm67, %v54, 0
  %v174 = vsel %vm67, %v55, 0
  %vm176 = vcmask 1042432
  %v178 = vsel %vm176, %v59, 0
  %180 = vmatprep.subr.mxu0 0.0
  %181 = vmatpush1.msra.mxu0 0.0
  %182 = vmatprep.subr.mxu0 0.0
  %183 = vmatpush1.msra.mxu0 0.0
  %184 = vmatprep.subr.mxu0 0.0
  %185 = vmatpush1.msra.mxu0 0.0
  %186 = vmatprep.subr.mxu0 0.0
  %187 = vmatpush1.msra.mxu0 0.0
  %188 = vmatprep.subr.mxu0 0.0
  %189 = vmatpush1.msra.mxu0 0.0
  %190 = vmatprep.subr.mxu0 0.0
  %191 = vmatpush1.msra.mxu0 0.0
  %192 = vmatprep.subr.mxu0 0.0
  %193 = vmatpush1.msra.mxu0 0.0
  %194 = vmatprep.subr.mxu0 0.0
  %195 = vmatpush1.msra.mxu0 0.0
  %196 = vmatprep.subr.mxu0 0.0
  %197 = vmatpush1.msra.mxu0 0.0
  %198 = vmatprep.subr.mxu0 0.0
  %199 = vmatpush1.msra.mxu0 0.0
  %200 = vmatprep.subr.mxu0 0.0
  %201 = vmatpush1.msra.mxu0 0.0
  %202 = vmatprep.subr.mxu0 0.0
  %203 = vmatpush1.msra.mxu0 0.0
  %204 = vmatprep.subr.mxu0 0.0
  %205 = vmatpush1.msra.mxu0 %v178
  %206 = vmatprep.subr.mxu0 0.0
  %207 = vmatpush1.msra.mxu0 %v58
  %208 = vmatprep.subr.mxu0 0.0
  %209 = vmatpush1.msra.mxu0 %v57
  %210 = vmatprep.subr.mxu0 0.0
  %211 = vmatpush1.msra.mxu0 %v56
  %212 = vmatprep.subr.mxu0 0.0
  %213 = vmatpush2.msra.mxu0 0.0
  %214 = vmatprep.subr.mxu0 0.0
  %215 = vmatpush2.msra.mxu0 0.0
  %216 = vmatprep.subr.mxu0 0.0
  %217 = vmatpush2.msra.mxu0 0.0
  %218 = vmatprep.subr.mxu0 0.0
  %219 = vmatpush2.msra.mxu0 0.0
  %220 = vmatprep.subr.mxu0 0.0
  %221 = vmatpush2.msra.mxu0 0.0
  %222 = vmatprep.subr.mxu0 0.0
  %223 = vmatpush2.msra.mxu0 0.0
  %224 = vmatprep.subr.mxu0 0.0
  %225 = vmatpush2.msra.mxu0 0.0
  %226 = vmatprep.subr.mxu0 0.0
  %227 = vmatpush2.msra.mxu0 0.0
  %228 = vmatprep.subr.mxu0 0.0
  %229 = vmatpush2.msra.mxu0 0.0
  %230 = vmatprep.subr.mxu0 0.0
  %231 = vmatpush2.msra.mxu0 0.0
  %232 = vmatprep.subr.mxu0 0.0
  %233 = vmatpush2.msra.mxu0 0.0
  %234 = vmatprep.subr.mxu0 0.0
  %235 = vmatpush2.msra.mxu0 0.0
  %236 = vmatprep.subr.mxu0 0.0
  %237 = vmatpush2.msra.mxu0 0.0
  %238 = vmatprep.subr.mxu0 0.0
  %239 = vmatpush2.msra.mxu0 0.0
  %240 = vmatprep.subr.mxu0 0.0
  %241 = vmatpush2.msra.mxu0 0.0
  %242 = vmatprep.subr.mxu0 0.0
  %243 = vmatpush2.msra.mxu0 0.0
  %244 = vmatprep.mubr.f32.mxu0 0.0
  %245 = vmatmul.mubr.f32.gmra.mxu0 %v69
  %v246 = vpop.f32.mrf.mxu0
  %v247 = vadd.f32 %v65, %v246
  %v248 = vpop.f32.mrf.mxu0
  %249 = vmatprep.mubr.f32.mxu0 0.0
  %250 = vmatmul.mubr.f32.gmra.mxu0 %v72
  %v251 = vpop.f32.mrf.mxu0
  %v252 = vadd.f32 %v65, %v251
  %v253 = vpop.f32.mrf.mxu0
  %254 = vmatprep.mubr.f32.mxu0 0.0
  %255 = vmatmul.mubr.f32.gmra.mxu0 %v75
  %v256 = vpop.f32.mrf.mxu0
  %v257 = vadd.f32 %v65, %v256
  %v258 = vpop.f32.mrf.mxu0
  %259 = vmatprep.mubr.f32.mxu0 0.0
  %260 = vmatmul.mubr.f32.gmra.mxu0 %v78
  %v261 = vpop.f32.mrf.mxu0
  %v262 = vadd.f32 %v65, %v261
  %v263 = vpop.f32.mrf.mxu0
  %264 = vmatprep.mubr.f32.mxu0 0.0
  %265 = vmatmul.mubr.f32.gmra.mxu0 %v81
  %v266 = vpop.f32.mrf.mxu0
  %v267 = vadd.f32 %v65, %v266
  %v268 = vpop.f32.mrf.mxu0
  %269 = vmatprep.mubr.f32.mxu0 0.0
  %270 = vmatmul.mubr.f32.gmra.mxu0 %v84
  %v271 = vpop.f32.mrf.mxu0
  %v272 = vadd.f32 %v65, %v271
  %v273 = vpop.f32.mrf.mxu0
  %274 = vmatprep.mubr.f32.mxu0 0.0
  %275 = vmatmul.mubr.f32.gmra.mxu0 %v87
  %v276 = vpop.f32.mrf.mxu0
  %v277 = vadd.f32 %v65, %v276
  %v278 = vpop.f32.mrf.mxu0
  %279 = vmatprep.mubr.f32.mxu0 0.0
  %280 = vmatmul.mubr.f32.gmra.mxu0 %v90
  %v281 = vpop.f32.mrf.mxu0
  %v282 = vadd.f32 %v65, %v281
  %v283 = vpop.f32.mrf.mxu0
  %284 = vmatprep.mubr.f32.mxu0 0.0
  %285 = vmatmul.mubr.f32.gmra.mxu0 %v93
  %v286 = vpop.f32.mrf.mxu0
  %v287 = vadd.f32 %v65, %v286
  %v288 = vpop.f32.mrf.mxu0
  %289 = vmatprep.mubr.f32.mxu0 0.0
  %290 = vmatmul.mubr.f32.gmra.mxu0 %v96
  %v291 = vpop.f32.mrf.mxu0
  %v292 = vadd.f32 %v65, %v291
  %v293 = vpop.f32.mrf.mxu0
  %294 = vmatprep.mubr.f32.mxu0 0.0
  %295 = vmatmul.mubr.f32.gmra.mxu0 %v99
  %v296 = vpop.f32.mrf.mxu0
  %v297 = vadd.f32 %v65, %v296
  %v298 = vpop.f32.mrf.mxu0
  %299 = vmatprep.mubr.f32.mxu0 0.0
  %300 = vmatmul.mubr.f32.gmra.mxu0 %v102
  %v301 = vpop.f32.mrf.mxu0
  %v302 = vadd.f32 %v65, %v301
  %v303 = vpop.f32.mrf.mxu0
  %304 = vmatprep.mubr.f32.mxu0 0.0
  %305 = vmatmul.mubr.f32.gmra.mxu0 %v105
  %v306 = vpop.f32.mrf.mxu0
  %v307 = vadd.f32 %v65, %v306
  %v308 = vpop.f32.mrf.mxu0
  %309 = vmatprep.mubr.f32.mxu0 0.0
  %310 = vmatmul.mubr.f32.gmra.mxu0 %v108
  %v311 = vpop.f32.mrf.mxu0
  %v312 = vadd.f32 %v65, %v311
  %v313 = vpop.f32.mrf.mxu0
  %314 = vmatprep.mubr.f32.mxu0 0.0
  %315 = vmatmul.mubr.f32.gmra.mxu0 %v111
  %v316 = vpop.f32.mrf.mxu0
  %v317 = vadd.f32 %v65, %v316
  %v318 = vpop.f32.mrf.mxu0
  %319 = vmatprep.mubr.f32.mxu0 0.0
  %320 = vmatmul.mubr.f32.gmra.mxu0 %v114
  %v321 = vpop.f32.mrf.mxu0
  %v322 = vadd.f32 %v65, %v321
  %v323 = vpop.f32.mrf.mxu0
  %324 = vmatprep.mubr.f32.mxu0 0.0
  %325 = vmatmul.mubr.f32.gmra.mxu0 %v117
  %v326 = vpop.f32.mrf.mxu0
  %v327 = vadd.f32 %v65, %v326
  %v328 = vpop.f32.mrf.mxu0
  %329 = vmatprep.mubr.f32.mxu0 0.0
  %330 = vmatmul.mubr.f32.gmra.mxu0 %v120
  %v331 = vpop.f32.mrf.mxu0
  %v332 = vadd.f32 %v65, %v331
  %v333 = vpop.f32.mrf.mxu0
  %334 = vmatprep.mubr.f32.mxu0 0.0
  %335 = vmatmul.mubr.f32.gmra.mxu0 %v123
  %v336 = vpop.f32.mrf.mxu0
  %v337 = vadd.f32 %v65, %v336
  %v338 = vpop.f32.mrf.mxu0
  %339 = vmatprep.mubr.f32.mxu0 0.0
  %340 = vmatmul.mubr.f32.gmra.mxu0 %v126
  %v341 = vpop.f32.mrf.mxu0
  %v342 = vadd.f32 %v65, %v341
  %v343 = vpop.f32.mrf.mxu0
  %344 = vmatprep.mubr.f32.mxu0 0.0
  %345 = vmatmul.mubr.f32.gmra.mxu0 %v129
  %v346 = vpop.f32.mrf.mxu0
  %v347 = vadd.f32 %v65, %v346
  %v348 = vpop.f32.mrf.mxu0
  %349 = vmatprep.mubr.f32.mxu0 0.0
  %350 = vmatmul.mubr.f32.gmra.mxu0 %v132
  %v351 = vpop.f32.mrf.mxu0
  %v352 = vadd.f32 %v65, %v351
  %v353 = vpop.f32.mrf.mxu0
  %354 = vmatprep.mubr.f32.mxu0 0.0
  %355 = vmatmul.mubr.f32.gmra.mxu0 %v135
  %v356 = vpop.f32.mrf.mxu0
  %v357 = vadd.f32 %v65, %v356
  %v358 = vpop.f32.mrf.mxu0
  %359 = vmatprep.mubr.f32.mxu0 0.0
  %360 = vmatmul.mubr.f32.gmra.mxu0 %v138
  %v361 = vpop.f32.mrf.mxu0
  %v362 = vadd.f32 %v65, %v361
  %v363 = vpop.f32.mrf.mxu0
  %364 = vmatprep.mubr.f32.mxu0 0.0
  %365 = vmatmul.mubr.f32.gmra.mxu0 %v141
  %v366 = vpop.f32.mrf.mxu0
  %v367 = vadd.f32 %v65, %v366
  %v368 = vpop.f32.mrf.mxu0
  %369 = vmatprep.mubr.f32.mxu0 0.0
  %370 = vmatmul.mubr.f32.gmra.mxu0 %v144
  %v371 = vpop.f32.mrf.mxu0
  %v372 = vadd.f32 %v65, %v371
  %v373 = vpop.f32.mrf.mxu0
  %374 = vmatprep.mubr.f32.mxu0 0.0
  %375 = vmatmul.mubr.f32.gmra.mxu0 %v147
  %v376 = vpop.f32.mrf.mxu0
  %v377 = vadd.f32 %v65, %v376
  %v378 = vpop.f32.mrf.mxu0
  %379 = vmatprep.mubr.f32.mxu0 0.0
  %380 = vmatmul.mubr.f32.gmra.mxu0 %v150
  %v381 = vpop.f32.mrf.mxu0
  %v382 = vadd.f32 %v65, %v381
  %v383 = vpop.f32.mrf.mxu0
  %384 = vmatprep.mubr.f32.mxu0 0.0
  %385 = vmatmul.mubr.f32.gmra.mxu0 %v153
  %v386 = vpop.f32.mrf.mxu0
  %v387 = vadd.f32 %v65, %v386
  %v388 = vpop.f32.mrf.mxu0
  %389 = vmatprep.mubr.f32.mxu0 0.0
  %390 = vmatmul.mubr.f32.gmra.mxu0 %v156
  %v391 = vpop.f32.mrf.mxu0
  %v392 = vadd.f32 %v65, %v391
  %v393 = vpop.f32.mrf.mxu0
  %394 = vmatprep.mubr.f32.mxu0 0.0
  %395 = vmatmul.mubr.f32.gmra.mxu0 %v159
  %v396 = vpop.f32.mrf.mxu0
  %v397 = vadd.f32 %v65, %v396
  %v398 = vpop.f32.mrf.mxu0
  %399 = vmatprep.mubr.f32.mxu0 0.0
  %400 = vmatmul.mubr.f32.gmra.mxu0 %v162
  %v401 = vpop.f32.mrf.mxu0
  %v402 = vadd.f32 %v65, %v401
  %v403 = vpop.f32.mrf.mxu0
  %404 = vmatprep.mubr.f32.mxu0 0.0
  %405 = vmatmul.mubr.f32.gmra.mxu0 %v165
  %v406 = vpop.f32.mrf.mxu0
  %v407 = vadd.f32 %v65, %v406
  %v408 = vpop.f32.mrf.mxu0
  %409 = vmatprep.mubr.f32.mxu0 0.0
  %410 = vmatmul.mubr.f32.gmra.mxu0 %v168
  %v411 = vpop.f32.mrf.mxu0
  %v412 = vadd.f32 %v65, %v411
  %v413 = vpop.f32.mrf.mxu0
  %414 = vmatprep.mubr.f32.mxu0 0.0
  %415 = vmatmul.mubr.f32.gmra.mxu0 %v171
  %v416 = vpop.f32.mrf.mxu0
  %v417 = vadd.f32 %v65, %v416
  %v418 = vpop.f32.mrf.mxu0
  %419 = vmatprep.mubr.f32.mxu0 0.0
  %420 = vmatmul.mubr.f32.gmra.mxu0 %v174
  %v421 = vpop.f32.mrf.mxu0
  %v422 = vadd.f32 %v65, %v421
  %v423 = vpop.f32.mrf.mxu0
  %424 = vdwg.mxu0
  %v425 = vmul.f32 %v247, 0.5
  %v426 = vmul.f32 %v252, 0.5
  %v427 = vmul.f32 %v257, 0.5
  %v428 = vmul.f32 %v262, 0.5
  %v429 = vmul.f32 %v267, 0.5
  %v430 = vmul.f32 %v272, 0.5
  %v431 = vmul.f32 %v277, 0.5
  %v432 = vmul.f32 %v282, 0.5
  %v433 = vmul.f32 %v287, 0.5
  %v434 = vmul.f32 %v292, 0.5
  %v435 = vmul.f32 %v297, 0.5
  %v436 = vmul.f32 %v302, 0.5
  %v437 = vmul.f32 %v307, 0.5
  %v438 = vmul.f32 %v312, 0.5
  %v439 = vmul.f32 %v317, 0.5
  %v440 = vmul.f32 %v322, 0.5
  %v441 = vmul.f32 %v327, 0.5
  %v442 = vmul.f32 %v332, 0.5
  %v443 = vmul.f32 %v337, 0.5
  %v444 = vmul.f32 %v342, 0.5
  %v445 = vmul.f32 %v347, 0.5
  %v446 = vmul.f32 %v352, 0.5
  %v447 = vmul.f32 %v357, 0.5
  %v448 = vmul.f32 %v362, 0.5
  %v449 = vmul.f32 %v367, 0.5
  %v450 = vmul.f32 %v372, 0.5
  %v451 = vmul.f32 %v377, 0.5
  %v452 = vmul.f32 %v382, 0.5
  %v453 = vmul.f32 %v387, 0.5
  %v454 = vmul.f32 %v392, 0.5
  %v455 = vmul.f32 %v397, 0.5
  %v456 = vmul.f32 %v402, 0.5
  %v457 = vmul.f32 %v407, 0.5
  %v458 = vmul.f32 %v412, 0.5
  %v459 = vmul.f32 %v417, 0.5
  %v460 = vmul.f32 %v422, 0.5
  %v461 = vmul.f32 %v247, 0.70710677
  %v462 = vmul.f32 %v252, 0.70710677
  %v463 = vmul.f32 %v257, 0.70710677
  %v464 = vmul.f32 %v262, 0.70710677
  %v465 = vmul.f32 %v267, 0.70710677
  %v466 = vmul.f32 %v272, 0.70710677
  %v467 = vmul.f32 %v277, 0.70710677
  %v468 = vmul.f32 %v282, 0.70710677
  %v469 = vmul.f32 %v287, 0.70710677
  %v470 = vmul.f32 %v292, 0.70710677
  %v471 = vmul.f32 %v297, 0.70710677
  %v472 = vmul.f32 %v302, 0.70710677
  %v473 = vmul.f32 %v307, 0.70710677
  %v474 = vmul.f32 %v312, 0.70710677
  %v475 = vmul.f32 %v317, 0.70710677
  %v476 = vmul.f32 %v322, 0.70710677
  %v477 = vmul.f32 %v327, 0.70710677
  %v478 = vmul.f32 %v332, 0.70710677
  %v479 = vmul.f32 %v337, 0.70710677
  %v480 = vmul.f32 %v342, 0.70710677
  %v481 = vmul.f32 %v347, 0.70710677
  %v482 = vmul.f32 %v352, 0.70710677
  %v483 = vmul.f32 %v357, 0.70710677
  %v484 = vmul.f32 %v362, 0.70710677
  %v485 = vmul.f32 %v367, 0.70710677
  %v486 = vmul.f32 %v372, 0.70710677
  %v487 = vmul.f32 %v377, 0.70710677
  %v488 = vmul.f32 %v382, 0.70710677
  %v489 = vmul.f32 %v387, 0.70710677
  %v490 = vmul.f32 %v392, 0.70710677
  %v491 = vmul.f32 %v397, 0.70710677
  %v492 = vmul.f32 %v402, 0.70710677
  %v493 = vmul.f32 %v407, 0.70710677
  %v494 = vmul.f32 %v412, 0.70710677
  %v495 = vmul.f32 %v417, 0.70710677
  %v496 = vmul.f32 %v422, 0.70710677
  %v497 = verf.f32.pop %v461
  %v498 = verf.f32.pop %v462
  %v499 = verf.f32.pop %v463
  %v500 = verf.f32.pop %v464
  %v501 = verf.f32.pop %v465
  %v502 = verf.f32.pop %v466
  %v503 = verf.f32.pop %v467
  %v504 = verf.f32.pop %v468
  %v505 = verf.f32.pop %v469
  %v506 = verf.f32.pop %v470
  %v507 = verf.f32.pop %v471
  %v508 = verf.f32.pop %v472
  %v509 = verf.f32.pop %v473
  %v510 = verf.f32.pop %v474
  %v511 = verf.f32.pop %v475
  %v512 = verf.f32.pop %v476
  %v513 = verf.f32.pop %v477
  %v514 = verf.f32.pop %v478
  %v515 = verf.f32.pop %v479
  %v516 = verf.f32.pop %v480
  %v517 = verf.f32.pop %v481
  %v518 = verf.f32.pop %v482
  %v519 = verf.f32.pop %v483
  %v520 = verf.f32.pop %v484
  %v521 = verf.f32.pop %v485
  %v522 = verf.f32.pop %v486
  %v523 = verf.f32.pop %v487
  %v524 = verf.f32.pop %v488
  %v525 = verf.f32.pop %v489
  %v526 = verf.f32.pop %v490
  %v527 = verf.f32.pop %v491
  %v528 = verf.f32.pop %v492
  %v529 = verf.f32.pop %v493
  %v530 = verf.f32.pop %v494
  %v531 = verf.f32.pop %v495
  %v532 = verf.f32.pop %v496
  %v533 = vadd.f32 %v497, 1.0
  %v534 = vadd.f32 %v498, 1.0
  %v535 = vadd.f32 %v499, 1.0
  %v536 = vadd.f32 %v500, 1.0
  %v537 = vadd.f32 %v501, 1.0
  %v538 = vadd.f32 %v502, 1.0
  %v539 = vadd.f32 %v503, 1.0
  %v540 = vadd.f32 %v504, 1.0
  %v541 = vadd.f32 %v505, 1.0
  %v542 = vadd.f32 %v506, 1.0
  %v543 = vadd.f32 %v507, 1.0
  %v544 = vadd.f32 %v508, 1.0
  %v545 = vadd.f32 %v509, 1.0
  %v546 = vadd.f32 %v510, 1.0
  %v547 = vadd.f32 %v511, 1.0
  %v548 = vadd.f32 %v512, 1.0
  %v549 = vadd.f32 %v513, 1.0
  %v550 = vadd.f32 %v514, 1.0
  %v551 = vadd.f32 %v515, 1.0
  %v552 = vadd.f32 %v516, 1.0
  %v553 = vadd.f32 %v517, 1.0
  %v554 = vadd.f32 %v518, 1.0
  %v555 = vadd.f32 %v519, 1.0
  %v556 = vadd.f32 %v520, 1.0
  %v557 = vadd.f32 %v521, 1.0
  %v558 = vadd.f32 %v522, 1.0
  %v559 = vadd.f32 %v523, 1.0
  %v560 = vadd.f32 %v524, 1.0
  %v561 = vadd.f32 %v525, 1.0
  %v562 = vadd.f32 %v526, 1.0
  %v563 = vadd.f32 %v527, 1.0
  %v564 = vadd.f32 %v528, 1.0
  %v565 = vadd.f32 %v529, 1.0
  %v566 = vadd.f32 %v530, 1.0
  %v567 = vadd.f32 %v531, 1.0
  %v568 = vadd.f32 %v532, 1.0
  %v569 = vmul.f32 %v425, %v533
  %v570 = vmul.f32 %v426, %v534
  %v571 = vmul.f32 %v427, %v535
  %v572 = vmul.f32 %v428, %v536
  %v573 = vmul.f32 %v429, %v537
  %v574 = vmul.f32 %v430, %v538
  %v575 = vmul.f32 %v431, %v539
  %v576 = vmul.f32 %v432, %v540
  %v577 = vmul.f32 %v433, %v541
  %v578 = vmul.f32 %v434, %v542
  %v579 = vmul.f32 %v435, %v543
  %v580 = vmul.f32 %v436, %v544
  %v581 = vmul.f32 %v437, %v545
  %v582 = vmul.f32 %v438, %v546
  %v583 = vmul.f32 %v439, %v547
  %v584 = vmul.f32 %v440, %v548
  %v585 = vmul.f32 %v441, %v549
  %v586 = vmul.f32 %v442, %v550
  %v587 = vmul.f32 %v443, %v551
  %v588 = vmul.f32 %v444, %v552
  %v589 = vmul.f32 %v445, %v553
  %v590 = vmul.f32 %v446, %v554
  %v591 = vmul.f32 %v447, %v555
  %v592 = vmul.f32 %v448, %v556
  %v593 = vmul.f32 %v449, %v557
  %v594 = vmul.f32 %v450, %v558
  %v595 = vmul.f32 %v451, %v559
  %v596 = vmul.f32 %v452, %v560
  %v597 = vmul.f32 %v453, %v561
  %v598 = vmul.f32 %v454, %v562
  %v599 = vmul.f32 %v455, %v563
  %v600 = vmul.f32 %v456, %v564
  %v601 = vmul.f32 %v457, %v565
  %v602 = vmul.f32 %v458, %v566
  %v603 = vmul.f32 %v459, %v567
  %v604 = vmul.f32 %v460, %v568
  %v605 = vadd.f32 %v569, %v578
  %v606 = vadd.f32 %v570, %v579
  %v607 = vadd.f32 %v571, %v580
  %v608 = vadd.f32 %v572, %v581
  %v609 = vadd.f32 %v573, %v582
  %v610 = vadd.f32 %v574, %v583
  %v611 = vadd.f32 %v575, %v584
  %v612 = vadd.f32 %v576, %v585
  %v613 = vadd.f32 %v577, %v586
  %v614 = vadd.f32 %v605, %v587
  %v615 = vadd.f32 %v606, %v588
  %v616 = vadd.f32 %v607, %v589
  %v617 = vadd.f32 %v608, %v590
  %v618 = vadd.f32 %v609, %v591
  %v619 = vadd.f32 %v610, %v592
  %v620 = vadd.f32 %v611, %v593
  %v621 = vadd.f32 %v612, %v594
  %v622 = vadd.f32 %v613, %v595
  %v623 = vadd.f32 %v614, %v596
  %v624 = vadd.f32 %v615, %v597
  %v625 = vadd.f32 %v616, %v598
  %v626 = vadd.f32 %v617, %v599
  %v627 = vadd.f32 %v618, %v600
  %v628 = vadd.f32 %v619, %v601
  %v629 = vadd.f32 %v620, %v602
  %v630 = vadd.f32 %v621, %v603
  %v631 = vadd.f32 %v622, %v604
  %v632 = vmul.f32 %v623, 0.25
  %v633 = vmul.f32 %v624, 0.25
  %v634 = vmul.f32 %v625, 0.25
  %v635 = vmul.f32 %v626, 0.25
  %v636 = vmul.f32 %v627, 0.25
  %v637 = vmul.f32 %v628, 0.25
  %v638 = vmul.f32 %v629, 0.25
  %v639 = vmul.f32 %v630, 0.25
  %v640 = vmul.f32 %v631, 0.25
  %v641 = vld [vmem:[%s3] sm:$0xff]
  %v642 = vld [vmem:[%s3 + $0x8] sm:$0xff]
  %v643 = vld [vmem:[%s3 + $0x10] sm:$0xff]
  %v644 = vld [vmem:[%s3 + $0x18] sm:$0xff]
  %s645 = scalar_lea.vmem %s3, 32
  %v646 = vld [vmem:[%s645] sm:$0xff]
  %v647 = vld [vmem:[%s645 + $0x8] sm:$0xff]
  %v648 = vld [vmem:[%s645 + $0x10] sm:$0xff]
  %v649 = vld [vmem:[%s645 + $0x18] sm:$0xff]
  %vm650 = vcmask 261120
  %v652 = vsel %vm650, %v633, 0
  %654 = vmatprep.subr.mxu0 0.0
  %655 = vmatpush1.msra.mxu0 0.0
  %656 = vmatprep.subr.mxu0 0.0
  %657 = vmatpush1.msra.mxu0 0.0
  %658 = vmatprep.subr.mxu0 0.0
  %659 = vmatpush1.msra.mxu0 0.0
  %660 = vmatprep.subr.mxu0 0.0
  %661 = vmatpush1.msra.mxu0 0.0
  %662 = vmatprep.subr.mxu0 0.0
  %663 = vmatpush1.msra.mxu0 0.0
  %664 = vmatprep.subr.mxu0 0.0
  %665 = vmatpush1.msra.mxu0 0.0
  %666 = vmatprep.subr.mxu0 0.0
  %667 = vmatpush1.msra.mxu0 0.0
  %668 = vmatprep.subr.mxu0 0.0
  %669 = vmatpush1.msra.mxu0 0.0
  %670 = vmatprep.subr.mxu0 0.0
  %671 = vmatpush1.msra.mxu0 0.0
  %672 = vmatprep.subr.mxu0 0.0
  %673 = vmatpush1.msra.mxu0 0.0
  %674 = vmatprep.subr.mxu0 0.0
  %675 = vmatpush1.msra.mxu0 0.0
  %676 = vmatprep.subr.mxu0 0.0
  %677 = vmatpush1.msra.mxu0 0.0
  %678 = vmatprep.subr.mxu0 0.0
  %679 = vmatpush1.msra.mxu0 %v649
  %680 = vmatprep.subr.mxu0 0.0
  %681 = vmatpush1.msra.mxu0 %v648
  %682 = vmatprep.subr.mxu0 0.0
  %683 = vmatpush1.msra.mxu0 %v647
  %684 = vmatprep.subr.mxu0 0.0
  %685 = vmatpush1.msra.mxu0 %v646
  %686 = vmatprep.subr.mxu0 0.0
  %687 = vmatpush2.msra.mxu0 0.0
  %688 = vmatprep.subr.mxu0 0.0
  %689 = vmatpush2.msra.mxu0 0.0
  %690 = vmatprep.subr.mxu0 0.0
  %691 = vmatpush2.msra.mxu0 0.0
  %692 = vmatprep.subr.mxu0 0.0
  %693 = vmatpush2.msra.mxu0 0.0
  %694 = vmatprep.subr.mxu0 0.0
  %695 = vmatpush2.msra.mxu0 0.0
  %696 = vmatprep.subr.mxu0 0.0
  %697 = vmatpush2.msra.mxu0 0.0
  %698 = vmatprep.subr.mxu0 0.0
  %699 = vmatpush2.msra.mxu0 0.0
  %700 = vmatprep.subr.mxu0 0.0
  %701 = vmatpush2.msra.mxu0 0.0
  %702 = vmatprep.subr.mxu0 0.0
  %703 = vmatpush2.msra.mxu0 0.0
  %704 = vmatprep.subr.mxu0 0.0
  %705 = vmatpush2.msra.mxu0 0.0
  %706 = vmatprep.subr.mxu0 0.0
  %707 = vmatpush2.msra.mxu0 0.0
  %708 = vmatprep.subr.mxu0 0.0
  %709 = vmatpush2.msra.mxu0 0.0
  %710 = vmatprep.subr.mxu0 0.0
  %711 = vmatpush2.msra.mxu0 0.0
  %712 = vmatprep.subr.mxu0 0.0
  %713 = vmatpush2.msra.mxu0 0.0
  %714 = vmatprep.subr.mxu0 0.0
  %715 = vmatpush2.msra.mxu0 0.0
  %716 = vmatprep.subr.mxu0 0.0
  %717 = vmatpush2.msra.mxu0 0.0
  %718 = vmatprep.mubr.f32.mxu0 0.0
  %719 = vmatmul.mubr.f32.gmra.mxu0 %v652
  %v720 = vpop.f32.mrf.mxu0
  %v721 = vadd.f32 0.0, %v720
  %v722 = vpop.f32.mrf.mxu0
  %723 = vdwg.mxu0
  %v725 = vsel %vm650, %v632, 0
  %727 = vmatprep.subr.mxu0 0.0
  %728 = vmatpush1.msra.mxu0 0.0
  %729 = vmatprep.subr.mxu0 0.0
  %730 = vmatpush1.msra.mxu0 0.0
  %731 = vmatprep.subr.mxu0 0.0
  %732 = vmatpush1.msra.mxu0 0.0
  %733 = vmatprep.subr.mxu0 0.0
  %734 = vmatpush1.msra.mxu0 0.0
  %735 = vmatprep.subr.mxu0 0.0
  %736 = vmatpush1.msra.mxu0 0.0
  %737 = vmatprep.subr.mxu0 0.0
  %738 = vmatpush1.msra.mxu0 0.0
  %739 = vmatprep.subr.mxu0 0.0
  %740 = vmatpush1.msra.mxu0 0.0
  %741 = vmatprep.subr.mxu0 0.0
  %742 = vmatpush1.msra.mxu0 0.0
  %743 = vmatprep.subr.mxu0 0.0
  %744 = vmatpush1.msra.mxu0 0.0
  %745 = vmatprep.subr.mxu0 0.0
  %746 = vmatpush1.msra.mxu0 0.0
  %747 = vmatprep.subr.mxu0 0.0
  %748 = vmatpush1.msra.mxu0 0.0
  %749 = vmatprep.subr.mxu0 0.0
  %750 = vmatpush1.msra.mxu0 0.0
  %751 = vmatprep.subr.mxu0 0.0
  %752 = vmatpush1.msra.mxu0 %v644
  %753 = vmatprep.subr.mxu0 0.0
  %754 = vmatpush1.msra.mxu0 %v643
  %755 = vmatprep.subr.mxu0 0.0
  %756 = vmatpush1.msra.mxu0 %v642
  %757 = vmatprep.subr.mxu0 0.0
  %758 = vmatpush1.msra.mxu0 %v641
  %759 = vmatprep.subr.mxu0 0.0
  %760 = vmatpush2.msra.mxu0 0.0
  %761 = vmatprep.subr.mxu0 0.0
  %762 = vmatpush2.msra.mxu0 0.0
  %763 = vmatprep.subr.mxu0 0.0
  %764 = vmatpush2.msra.mxu0 0.0
  %765 = vmatprep.subr.mxu0 0.0
  %766 = vmatpush2.msra.mxu0 0.0
  %767 = vmatprep.subr.mxu0 0.0
  %768 = vmatpush2.msra.mxu0 0.0
  %769 = vmatprep.subr.mxu0 0.0
  %770 = vmatpush2.msra.mxu0 0.0
  %771 = vmatprep.subr.mxu0 0.0
  %772 = vmatpush2.msra.mxu0 0.0
  %773 = vmatprep.subr.mxu0 0.0
  %774 = vmatpush2.msra.mxu0 0.0
  %775 = vmatprep.subr.mxu0 0.0
  %776 = vmatpush2.msra.mxu0 0.0
  %777 = vmatprep.subr.mxu0 0.0
  %778 = vmatpush2.msra.mxu0 0.0
  %779 = vmatprep.subr.mxu0 0.0
  %780 = vmatpush2.msra.mxu0 0.0
  %781 = vmatprep.subr.mxu0 0.0
  %782 = vmatpush2.msra.mxu0 0.0
  %783 = vmatprep.subr.mxu0 0.0
  %784 = vmatpush2.msra.mxu0 0.0
  %785 = vmatprep.subr.mxu0 0.0
  %786 = vmatpush2.msra.mxu0 0.0
  %787 = vmatprep.subr.mxu0 0.0
  %788 = vmatpush2.msra.mxu0 0.0
  %789 = vmatprep.subr.mxu0 0.0
  %790 = vmatpush2.msra.mxu0 0.0
  %791 = vmatprep.mubr.f32.mxu0 0.0
  %792 = vmatmul.mubr.f32.gmra.mxu0 %v725
  %v793 = vpop.f32.mrf.mxu0
  %v794 = vadd.f32 %v721, %v793
  %v795 = vpop.f32.mrf.mxu0
  %796 = vdwg.mxu0
  %s797 = scalar_lea.vmem %s3, 64
  %v798 = vld [vmem:[%s797] sm:$0xff]
  %v799 = vld [vmem:[%s797 + $0x8] sm:$0xff]
  %v800 = vld [vmem:[%s797 + $0x10] sm:$0xff]
  %v801 = vld [vmem:[%s797 + $0x18] sm:$0xff]
  %v803 = vsel %vm650, %v634, 0
  %805 = vmatprep.subr.mxu0 0.0
  %806 = vmatpush1.msra.mxu0 0.0
  %807 = vmatprep.subr.mxu0 0.0
  %808 = vmatpush1.msra.mxu0 0.0
  %809 = vmatprep.subr.mxu0 0.0
  %810 = vmatpush1.msra.mxu0 0.0
  %811 = vmatprep.subr.mxu0 0.0
  %812 = vmatpush1.msra.mxu0 0.0
  %813 = vmatprep.subr.mxu0 0.0
  %814 = vmatpush1.msra.mxu0 0.0
  %815 = vmatprep.subr.mxu0 0.0
  %816 = vmatpush1.msra.mxu0 0.0
  %817 = vmatprep.subr.mxu0 0.0
  %818 = vmatpush1.msra.mxu0 0.0
  %819 = vmatprep.subr.mxu0 0.0
  %820 = vmatpush1.msra.mxu0 0.0
  %821 = vmatprep.subr.mxu0 0.0
  %822 = vmatpush1.msra.mxu0 0.0
  %823 = vmatprep.subr.mxu0 0.0
  %824 = vmatpush1.msra.mxu0 0.0
  %825 = vmatprep.subr.mxu0 0.0
  %826 = vmatpush1.msra.mxu0 0.0
  %827 = vmatprep.subr.mxu0 0.0
  %828 = vmatpush1.msra.mxu0 0.0
  %829 = vmatprep.subr.mxu0 0.0
  %830 = vmatpush1.msra.mxu0 %v801
  %831 = vmatprep.subr.mxu0 0.0
  %832 = vmatpush1.msra.mxu0 %v800
  %833 = vmatprep.subr.mxu0 0.0
  %834 = vmatpush1.msra.mxu0 %v799
  %835 = vmatprep.subr.mxu0 0.0
  %836 = vmatpush1.msra.mxu0 %v798
  %837 = vmatprep.subr.mxu0 0.0
  %838 = vmatpush2.msra.mxu0 0.0
  %839 = vmatprep.subr.mxu0 0.0
  %840 = vmatpush2.msra.mxu0 0.0
  %841 = vmatprep.subr.mxu0 0.0
  %842 = vmatpush2.msra.mxu0 0.0
  %843 = vmatprep.subr.mxu0 0.0
  %844 = vmatpush2.msra.mxu0 0.0
  %845 = vmatprep.subr.mxu0 0.0
  %846 = vmatpush2.msra.mxu0 0.0
  %847 = vmatprep.subr.mxu0 0.0
  %848 = vmatpush2.msra.mxu0 0.0
  %849 = vmatprep.subr.mxu0 0.0
  %850 = vmatpush2.msra.mxu0 0.0
  %851 = vmatprep.subr.mxu0 0.0
  %852 = vmatpush2.msra.mxu0 0.0
  %853 = vmatprep.subr.mxu0 0.0
  %854 = vmatpush2.msra.mxu0 0.0
  %855 = vmatprep.subr.mxu0 0.0
  %856 = vmatpush2.msra.mxu0 0.0
  %857 = vmatprep.subr.mxu0 0.0
  %858 = vmatpush2.msra.mxu0 0.0
  %859 = vmatprep.subr.mxu0 0.0
  %860 = vmatpush2.msra.mxu0 0.0
  %861 = vmatprep.subr.mxu0 0.0
  %862 = vmatpush2.msra.mxu0 0.0
  %863 = vmatprep.subr.mxu0 0.0
  %864 = vmatpush2.msra.mxu0 0.0
  %865 = vmatprep.subr.mxu0 0.0
  %866 = vmatpush2.msra.mxu0 0.0
  %867 = vmatprep.subr.mxu0 0.0
  %868 = vmatpush2.msra.mxu0 0.0
  %869 = vmatprep.mubr.f32.mxu0 0.0
  %870 = vmatmul.mubr.f32.gmra.mxu0 %v803
  %v871 = vpop.f32.mrf.mxu0
  %v872 = vadd.f32 0.0, %v871
  %v873 = vpop.f32.mrf.mxu0
  %874 = vdwg.mxu0
  %v875 = vadd.f32 %v794, %v872
  %s876 = scalar_lea.vmem %s3, 96
  %v877 = vld [vmem:[%s876] sm:$0xff]
  %v878 = vld [vmem:[%s876 + $0x8] sm:$0xff]
  %v879 = vld [vmem:[%s876 + $0x10] sm:$0xff]
  %v880 = vld [vmem:[%s876 + $0x18] sm:$0xff]
  %v882 = vsel %vm650, %v635, 0
  %884 = vmatprep.subr.mxu0 0.0
  %885 = vmatpush1.msra.mxu0 0.0
  %886 = vmatprep.subr.mxu0 0.0
  %887 = vmatpush1.msra.mxu0 0.0
  %888 = vmatprep.subr.mxu0 0.0
  %889 = vmatpush1.msra.mxu0 0.0
  %890 = vmatprep.subr.mxu0 0.0
  %891 = vmatpush1.msra.mxu0 0.0
  %892 = vmatprep.subr.mxu0 0.0
  %893 = vmatpush1.msra.mxu0 0.0
  %894 = vmatprep.subr.mxu0 0.0
  %895 = vmatpush1.msra.mxu0 0.0
  %896 = vmatprep.subr.mxu0 0.0
  %897 = vmatpush1.msra.mxu0 0.0
  %898 = vmatprep.subr.mxu0 0.0
  %899 = vmatpush1.msra.mxu0 0.0
  %900 = vmatprep.subr.mxu0 0.0
  %901 = vmatpush1.msra.mxu0 0.0
  %902 = vmatprep.subr.mxu0 0.0
  %903 = vmatpush1.msra.mxu0 0.0
  %904 = vmatprep.subr.mxu0 0.0
  %905 = vmatpush1.msra.mxu0 0.0
  %906 = vmatprep.subr.mxu0 0.0
  %907 = vmatpush1.msra.mxu0 0.0
  %908 = vmatprep.subr.mxu0 0.0
  %909 = vmatpush1.msra.mxu0 %v880
  %910 = vmatprep.subr.mxu0 0.0
  %911 = vmatpush1.msra.mxu0 %v879
  %912 = vmatprep.subr.mxu0 0.0
  %913 = vmatpush1.msra.mxu0 %v878
  %914 = vmatprep.subr.mxu0 0.0
  %915 = vmatpush1.msra.mxu0 %v877
  %916 = vmatprep.subr.mxu0 0.0
  %917 = vmatpush2.msra.mxu0 0.0
  %918 = vmatprep.subr.mxu0 0.0
  %919 = vmatpush2.msra.mxu0 0.0
  %920 = vmatprep.subr.mxu0 0.0
  %921 = vmatpush2.msra.mxu0 0.0
  %922 = vmatprep.subr.mxu0 0.0
  %923 = vmatpush2.msra.mxu0 0.0
  %924 = vmatprep.subr.mxu0 0.0
  %925 = vmatpush2.msra.mxu0 0.0
  %926 = vmatprep.subr.mxu0 0.0
  %927 = vmatpush2.msra.mxu0 0.0
  %928 = vmatprep.subr.mxu0 0.0
  %929 = vmatpush2.msra.mxu0 0.0
  %930 = vmatprep.subr.mxu0 0.0
  %931 = vmatpush2.msra.mxu0 0.0
  %932 = vmatprep.subr.mxu0 0.0
  %933 = vmatpush2.msra.mxu0 0.0
  %934 = vmatprep.subr.mxu0 0.0
  %935 = vmatpush2.msra.mxu0 0.0
  %936 = vmatprep.subr.mxu0 0.0
  %937 = vmatpush2.msra.mxu0 0.0
  %938 = vmatprep.subr.mxu0 0.0
  %939 = vmatpush2.msra.mxu0 0.0
  %940 = vmatprep.subr.mxu0 0.0
  %941 = vmatpush2.msra.mxu0 0.0
  %942 = vmatprep.subr.mxu0 0.0
  %943 = vmatpush2.msra.mxu0 0.0
  %944 = vmatprep.subr.mxu0 0.0
  %945 = vmatpush2.msra.mxu0 0.0
  %946 = vmatprep.subr.mxu0 0.0
  %947 = vmatpush2.msra.mxu0 0.0
  %948 = vmatprep.mubr.f32.mxu0 0.0
  %949 = vmatmul.mubr.f32.gmra.mxu0 %v882
  %v950 = vpop.f32.mrf.mxu0
  %v951 = vadd.f32 0.0, %v950
  %v952 = vpop.f32.mrf.mxu0
  %953 = vdwg.mxu0
  %v954 = vadd.f32 %v875, %v951
  %s955 = scalar_lea.vmem %s3, 128
  %v956 = vld [vmem:[%s955] sm:$0xff]
  %v957 = vld [vmem:[%s955 + $0x8] sm:$0xff]
  %v958 = vld [vmem:[%s955 + $0x10] sm:$0xff]
  %v959 = vld [vmem:[%s955 + $0x18] sm:$0xff]
  %v961 = vsel %vm650, %v636, 0
  %963 = vmatprep.subr.mxu0 0.0
  %964 = vmatpush1.msra.mxu0 0.0
  %965 = vmatprep.subr.mxu0 0.0
  %966 = vmatpush1.msra.mxu0 0.0
  %967 = vmatprep.subr.mxu0 0.0
  %968 = vmatpush1.msra.mxu0 0.0
  %969 = vmatprep.subr.mxu0 0.0
  %970 = vmatpush1.msra.mxu0 0.0
  %971 = vmatprep.subr.mxu0 0.0
  %972 = vmatpush1.msra.mxu0 0.0
  %973 = vmatprep.subr.mxu0 0.0
  %974 = vmatpush1.msra.mxu0 0.0
  %975 = vmatprep.subr.mxu0 0.0
  %976 = vmatpush1.msra.mxu0 0.0
  %977 = vmatprep.subr.mxu0 0.0
  %978 = vmatpush1.msra.mxu0 0.0
  %979 = vmatprep.subr.mxu0 0.0
  %980 = vmatpush1.msra.mxu0 0.0
  %981 = vmatprep.subr.mxu0 0.0
  %982 = vmatpush1.msra.mxu0 0.0
  %983 = vmatprep.subr.mxu0 0.0
  %984 = vmatpush1.msra.mxu0 0.0
  %985 = vmatprep.subr.mxu0 0.0
  %986 = vmatpush1.msra.mxu0 0.0
  %987 = vmatprep.subr.mxu0 0.0
  %988 = vmatpush1.msra.mxu0 %v959
  %989 = vmatprep.subr.mxu0 0.0
  %990 = vmatpush1.msra.mxu0 %v958
  %991 = vmatprep.subr.mxu0 0.0
  %992 = vmatpush1.msra.mxu0 %v957
  %993 = vmatprep.subr.mxu0 0.0
  %994 = vmatpush1.msra.mxu0 %v956
  %995 = vmatprep.subr.mxu0 0.0
  %996 = vmatpush2.msra.mxu0 0.0
  %997 = vmatprep.subr.mxu0 0.0
  %998 = vmatpush2.msra.mxu0 0.0
  %999 = vmatprep.subr.mxu0 0.0
  %1000 = vmatpush2.msra.mxu0 0.0
  %1001 = vmatprep.subr.mxu0 0.0
  %1002 = vmatpush2.msra.mxu0 0.0
  %1003 = vmatprep.subr.mxu0 0.0
  %1004 = vmatpush2.msra.mxu0 0.0
  %1005 = vmatprep.subr.mxu0 0.0
  %1006 = vmatpush2.msra.mxu0 0.0
  %1007 = vmatprep.subr.mxu0 0.0
  %1008 = vmatpush2.msra.mxu0 0.0
  %1009 = vmatprep.subr.mxu0 0.0
  %1010 = vmatpush2.msra.mxu0 0.0
  %1011 = vmatprep.subr.mxu0 0.0
  %1012 = vmatpush2.msra.mxu0 0.0
  %1013 = vmatprep.subr.mxu0 0.0
  %1014 = vmatpush2.msra.mxu0 0.0
  %1015 = vmatprep.subr.mxu0 0.0
  %1016 = vmatpush2.msra.mxu0 0.0
  %1017 = vmatprep.subr.mxu0 0.0
  %1018 = vmatpush2.msra.mxu0 0.0
  %1019 = vmatprep.subr.mxu0 0.0
  %1020 = vmatpush2.msra.mxu0 0.0
  %1021 = vmatprep.subr.mxu0 0.0
  %1022 = vmatpush2.msra.mxu0 0.0
  %1023 = vmatprep.subr.mxu0 0.0
  %1024 = vmatpush2.msra.mxu0 0.0
  %1025 = vmatprep.subr.mxu0 0.0
  %1026 = vmatpush2.msra.mxu0 0.0
  %1027 = vmatprep.mubr.f32.mxu0 0.0
  %1028 = vmatmul.mubr.f32.gmra.mxu0 %v961
  %v1029 = vpop.f32.mrf.mxu0
  %v1030 = vadd.f32 0.0, %v1029
  %v1031 = vpop.f32.mrf.mxu0
  %1032 = vdwg.mxu0
  %v1033 = vadd.f32 %v954, %v1030
  %s1034 = scalar_lea.vmem %s3, 160
  %v1035 = vld [vmem:[%s1034] sm:$0xff]
  %v1036 = vld [vmem:[%s1034 + $0x8] sm:$0xff]
  %v1037 = vld [vmem:[%s1034 + $0x10] sm:$0xff]
  %v1038 = vld [vmem:[%s1034 + $0x18] sm:$0xff]
  %v1040 = vsel %vm650, %v637, 0
  %1042 = vmatprep.subr.mxu0 0.0
  %1043 = vmatpush1.msra.mxu0 0.0
  %1044 = vmatprep.subr.mxu0 0.0
  %1045 = vmatpush1.msra.mxu0 0.0
  %1046 = vmatprep.subr.mxu0 0.0
  %1047 = vmatpush1.msra.mxu0 0.0
  %1048 = vmatprep.subr.mxu0 0.0
  %1049 = vmatpush1.msra.mxu0 0.0
  %1050 = vmatprep.subr.mxu0 0.0
  %1051 = vmatpush1.msra.mxu0 0.0
  %1052 = vmatprep.subr.mxu0 0.0
  %1053 = vmatpush1.msra.mxu0 0.0
  %1054 = vmatprep.subr.mxu0 0.0
  %1055 = vmatpush1.msra.mxu0 0.0
  %1056 = vmatprep.subr.mxu0 0.0
  %1057 = vmatpush1.msra.mxu0 0.0
  %1058 = vmatprep.subr.mxu0 0.0
  %1059 = vmatpush1.msra.mxu0 0.0
  %1060 = vmatprep.subr.mxu0 0.0
  %1061 = vmatpush1.msra.mxu0 0.0
  %1062 = vmatprep.subr.mxu0 0.0
  %1063 = vmatpush1.msra.mxu0 0.0
  %1064 = vmatprep.subr.mxu0 0.0
  %1065 = vmatpush1.msra.mxu0 0.0
  %1066 = vmatprep.subr.mxu0 0.0
  %1067 = vmatpush1.msra.mxu0 %v1038
  %1068 = vmatprep.subr.mxu0 0.0
  %1069 = vmatpush1.msra.mxu0 %v1037
  %1070 = vmatprep.subr.mxu0 0.0
  %1071 = vmatpush1.msra.mxu0 %v1036
  %1072 = vmatprep.subr.mxu0 0.0
  %1073 = vmatpush1.msra.mxu0 %v1035
  %1074 = vmatprep.subr.mxu0 0.0
  %1075 = vmatpush2.msra.mxu0 0.0
  %1076 = vmatprep.subr.mxu0 0.0
  %1077 = vmatpush2.msra.mxu0 0.0
  %1078 = vmatprep.subr.mxu0 0.0
  %1079 = vmatpush2.msra.mxu0 0.0
  %1080 = vmatprep.subr.mxu0 0.0
  %1081 = vmatpush2.msra.mxu0 0.0
  %1082 = vmatprep.subr.mxu0 0.0
  %1083 = vmatpush2.msra.mxu0 0.0
  %1084 = vmatprep.subr.mxu0 0.0
  %1085 = vmatpush2.msra.mxu0 0.0
  %1086 = vmatprep.subr.mxu0 0.0
  %1087 = vmatpush2.msra.mxu0 0.0
  %1088 = vmatprep.subr.mxu0 0.0
  %1089 = vmatpush2.msra.mxu0 0.0
  %1090 = vmatprep.subr.mxu0 0.0
  %1091 = vmatpush2.msra.mxu0 0.0
  %1092 = vmatprep.subr.mxu0 0.0
  %1093 = vmatpush2.msra.mxu0 0.0
  %1094 = vmatprep.subr.mxu0 0.0
  %1095 = vmatpush2.msra.mxu0 0.0
  %1096 = vmatprep.subr.mxu0 0.0
  %1097 = vmatpush2.msra.mxu0 0.0
  %1098 = vmatprep.subr.mxu0 0.0
  %1099 = vmatpush2.msra.mxu0 0.0
  %1100 = vmatprep.subr.mxu0 0.0
  %1101 = vmatpush2.msra.mxu0 0.0
  %1102 = vmatprep.subr.mxu0 0.0
  %1103 = vmatpush2.msra.mxu0 0.0
  %1104 = vmatprep.subr.mxu0 0.0
  %1105 = vmatpush2.msra.mxu0 0.0
  %1106 = vmatprep.mubr.f32.mxu0 0.0
  %1107 = vmatmul.mubr.f32.gmra.mxu0 %v1040
  %v1108 = vpop.f32.mrf.mxu0
  %v1109 = vadd.f32 0.0, %v1108
  %v1110 = vpop.f32.mrf.mxu0
  %1111 = vdwg.mxu0
  %v1112 = vadd.f32 %v1033, %v1109
  %s1113 = scalar_lea.vmem %s3, 192
  %v1114 = vld [vmem:[%s1113] sm:$0xff]
  %v1115 = vld [vmem:[%s1113 + $0x8] sm:$0xff]
  %v1116 = vld [vmem:[%s1113 + $0x10] sm:$0xff]
  %v1117 = vld [vmem:[%s1113 + $0x18] sm:$0xff]
  %v1119 = vsel %vm650, %v638, 0
  %1121 = vmatprep.subr.mxu0 0.0
  %1122 = vmatpush1.msra.mxu0 0.0
  %1123 = vmatprep.subr.mxu0 0.0
  %1124 = vmatpush1.msra.mxu0 0.0
  %1125 = vmatprep.subr.mxu0 0.0
  %1126 = vmatpush1.msra.mxu0 0.0
  %1127 = vmatprep.subr.mxu0 0.0
  %1128 = vmatpush1.msra.mxu0 0.0
  %1129 = vmatprep.subr.mxu0 0.0
  %1130 = vmatpush1.msra.mxu0 0.0
  %1131 = vmatprep.subr.mxu0 0.0
  %1132 = vmatpush1.msra.mxu0 0.0
  %1133 = vmatprep.subr.mxu0 0.0
  %1134 = vmatpush1.msra.mxu0 0.0
  %1135 = vmatprep.subr.mxu0 0.0
  %1136 = vmatpush1.msra.mxu0 0.0
  %1137 = vmatprep.subr.mxu0 0.0
  %1138 = vmatpush1.msra.mxu0 0.0
  %1139 = vmatprep.subr.mxu0 0.0
  %1140 = vmatpush1.msra.mxu0 0.0
  %1141 = vmatprep.subr.mxu0 0.0
  %1142 = vmatpush1.msra.mxu0 0.0
  %1143 = vmatprep.subr.mxu0 0.0
  %1144 = vmatpush1.msra.mxu0 0.0
  %1145 = vmatprep.subr.mxu0 0.0
  %1146 = vmatpush1.msra.mxu0 %v1117
  %1147 = vmatprep.subr.mxu0 0.0
  %1148 = vmatpush1.msra.mxu0 %v1116
  %1149 = vmatprep.subr.mxu0 0.0
  %1150 = vmatpush1.msra.mxu0 %v1115
  %1151 = vmatprep.subr.mxu0 0.0
  %1152 = vmatpush1.msra.mxu0 %v1114
  %1153 = vmatprep.subr.mxu0 0.0
  %1154 = vmatpush2.msra.mxu0 0.0
  %1155 = vmatprep.subr.mxu0 0.0
  %1156 = vmatpush2.msra.mxu0 0.0
  %1157 = vmatprep.subr.mxu0 0.0
  %1158 = vmatpush2.msra.mxu0 0.0
  %1159 = vmatprep.subr.mxu0 0.0
  %1160 = vmatpush2.msra.mxu0 0.0
  %1161 = vmatprep.subr.mxu0 0.0
  %1162 = vmatpush2.msra.mxu0 0.0
  %1163 = vmatprep.subr.mxu0 0.0
  %1164 = vmatpush2.msra.mxu0 0.0
  %1165 = vmatprep.subr.mxu0 0.0
  %1166 = vmatpush2.msra.mxu0 0.0
  %1167 = vmatprep.subr.mxu0 0.0
  %1168 = vmatpush2.msra.mxu0 0.0
  %1169 = vmatprep.subr.mxu0 0.0
  %1170 = vmatpush2.msra.mxu0 0.0
  %1171 = vmatprep.subr.mxu0 0.0
  %1172 = vmatpush2.msra.mxu0 0.0
  %1173 = vmatprep.subr.mxu0 0.0
  %1174 = vmatpush2.msra.mxu0 0.0
  %1175 = vmatprep.subr.mxu0 0.0
  %1176 = vmatpush2.msra.mxu0 0.0
  %1177 = vmatprep.subr.mxu0 0.0
  %1178 = vmatpush2.msra.mxu0 0.0
  %1179 = vmatprep.subr.mxu0 0.0
  %1180 = vmatpush2.msra.mxu0 0.0
  %1181 = vmatprep.subr.mxu0 0.0
  %1182 = vmatpush2.msra.mxu0 0.0
  %1183 = vmatprep.subr.mxu0 0.0
  %1184 = vmatpush2.msra.mxu0 0.0
  %1185 = vmatprep.mubr.f32.mxu0 0.0
  %1186 = vmatmul.mubr.f32.gmra.mxu0 %v1119
  %v1187 = vpop.f32.mrf.mxu0
  %v1188 = vadd.f32 0.0, %v1187
  %v1189 = vpop.f32.mrf.mxu0
  %1190 = vdwg.mxu0
  %v1191 = vadd.f32 %v1112, %v1188
  %s1192 = scalar_lea.vmem %s3, 224
  %v1193 = vld [vmem:[%s1192] sm:$0xff]
  %v1194 = vld [vmem:[%s1192 + $0x8] sm:$0xff]
  %v1195 = vld [vmem:[%s1192 + $0x10] sm:$0xff]
  %v1196 = vld [vmem:[%s1192 + $0x18] sm:$0xff]
  %v1198 = vsel %vm650, %v639, 0
  %1200 = vmatprep.subr.mxu0 0.0
  %1201 = vmatpush1.msra.mxu0 0.0
  %1202 = vmatprep.subr.mxu0 0.0
  %1203 = vmatpush1.msra.mxu0 0.0
  %1204 = vmatprep.subr.mxu0 0.0
  %1205 = vmatpush1.msra.mxu0 0.0
  %1206 = vmatprep.subr.mxu0 0.0
  %1207 = vmatpush1.msra.mxu0 0.0
  %1208 = vmatprep.subr.mxu0 0.0
  %1209 = vmatpush1.msra.mxu0 0.0
  %1210 = vmatprep.subr.mxu0 0.0
  %1211 = vmatpush1.msra.mxu0 0.0
  %1212 = vmatprep.subr.mxu0 0.0
  %1213 = vmatpush1.msra.mxu0 0.0
  %1214 = vmatprep.subr.mxu0 0.0
  %1215 = vmatpush1.msra.mxu0 0.0
  %1216 = vmatprep.subr.mxu0 0.0
  %1217 = vmatpush1.msra.mxu0 0.0
  %1218 = vmatprep.subr.mxu0 0.0
  %1219 = vmatpush1.msra.mxu0 0.0
  %1220 = vmatprep.subr.mxu0 0.0
  %1221 = vmatpush1.msra.mxu0 0.0
  %1222 = vmatprep.subr.mxu0 0.0
  %1223 = vmatpush1.msra.mxu0 0.0
  %1224 = vmatprep.subr.mxu0 0.0
  %1225 = vmatpush1.msra.mxu0 %v1196
  %1226 = vmatprep.subr.mxu0 0.0
  %1227 = vmatpush1.msra.mxu0 %v1195
  %1228 = vmatprep.subr.mxu0 0.0
  %1229 = vmatpush1.msra.mxu0 %v1194
  %1230 = vmatprep.subr.mxu0 0.0
  %1231 = vmatpush1.msra.mxu0 %v1193
  %1232 = vmatprep.subr.mxu0 0.0
  %1233 = vmatpush2.msra.mxu0 0.0
  %1234 = vmatprep.subr.mxu0 0.0
  %1235 = vmatpush2.msra.mxu0 0.0
  %1236 = vmatprep.subr.mxu0 0.0
  %1237 = vmatpush2.msra.mxu0 0.0
  %1238 = vmatprep.subr.mxu0 0.0
  %1239 = vmatpush2.msra.mxu0 0.0
  %1240 = vmatprep.subr.mxu0 0.0
  %1241 = vmatpush2.msra.mxu0 0.0
  %1242 = vmatprep.subr.mxu0 0.0
  %1243 = vmatpush2.msra.mxu0 0.0
  %1244 = vmatprep.subr.mxu0 0.0
  %1245 = vmatpush2.msra.mxu0 0.0
  %1246 = vmatprep.subr.mxu0 0.0
  %1247 = vmatpush2.msra.mxu0 0.0
  %1248 = vmatprep.subr.mxu0 0.0
  %1249 = vmatpush2.msra.mxu0 0.0
  %1250 = vmatprep.subr.mxu0 0.0
  %1251 = vmatpush2.msra.mxu0 0.0
  %1252 = vmatprep.subr.mxu0 0.0
  %1253 = vmatpush2.msra.mxu0 0.0
  %1254 = vmatprep.subr.mxu0 0.0
  %1255 = vmatpush2.msra.mxu0 0.0
  %1256 = vmatprep.subr.mxu0 0.0
  %1257 = vmatpush2.msra.mxu0 0.0
  %1258 = vmatprep.subr.mxu0 0.0
  %1259 = vmatpush2.msra.mxu0 0.0
  %1260 = vmatprep.subr.mxu0 0.0
  %1261 = vmatpush2.msra.mxu0 0.0
  %1262 = vmatprep.subr.mxu0 0.0
  %1263 = vmatpush2.msra.mxu0 0.0
  %1264 = vmatprep.mubr.f32.mxu0 0.0
  %1265 = vmatmul.mubr.f32.gmra.mxu0 %v1198
  %v1266 = vpop.f32.mrf.mxu0
  %v1267 = vadd.f32 0.0, %v1266
  %v1268 = vpop.f32.mrf.mxu0
  %1269 = vdwg.mxu0
  %v1270 = vadd.f32 %v1191, %v1267
  %s1271 = scalar_lea.vmem %s3, 256
  %v1272 = vld [vmem:[%s1271] sm:$0xff]
  %v1273 = vld [vmem:[%s1271 + $0x8] sm:$0xff]
  %v1274 = vld [vmem:[%s1271 + $0x10] sm:$0xff]
  %v1275 = vld [vmem:[%s1271 + $0x18] sm:$0xff]
  %v1277 = vsel %vm650, %v640, 0
  %1279 = vmatprep.subr.mxu0 0.0
  %1280 = vmatpush1.msra.mxu0 0.0
  %1281 = vmatprep.subr.mxu0 0.0
  %1282 = vmatpush1.msra.mxu0 0.0
  %1283 = vmatprep.subr.mxu0 0.0
  %1284 = vmatpush1.msra.mxu0 0.0
  %1285 = vmatprep.subr.mxu0 0.0
  %1286 = vmatpush1.msra.mxu0 0.0
  %1287 = vmatprep.subr.mxu0 0.0
  %1288 = vmatpush1.msra.mxu0 0.0
  %1289 = vmatprep.subr.mxu0 0.0
  %1290 = vmatpush1.msra.mxu0 0.0
  %1291 = vmatprep.subr.mxu0 0.0
  %1292 = vmatpush1.msra.mxu0 0.0
  %1293 = vmatprep.subr.mxu0 0.0
  %1294 = vmatpush1.msra.mxu0 0.0
  %1295 = vmatprep.subr.mxu0 0.0
  %1296 = vmatpush1.msra.mxu0 0.0
  %1297 = vmatprep.subr.mxu0 0.0
  %1298 = vmatpush1.msra.mxu0 0.0
  %1299 = vmatprep.subr.mxu0 0.0
  %1300 = vmatpush1.msra.mxu0 0.0
  %1301 = vmatprep.subr.mxu0 0.0
  %1302 = vmatpush1.msra.mxu0 0.0
  %1303 = vmatprep.subr.mxu0 0.0
  %1304 = vmatpush1.msra.mxu0 %v1275
  %1305 = vmatprep.subr.mxu0 0.0
  %1306 = vmatpush1.msra.mxu0 %v1274
  %1307 = vmatprep.subr.mxu0 0.0
  %1308 = vmatpush1.msra.mxu0 %v1273
  %1309 = vmatprep.subr.mxu0 0.0
  %1310 = vmatpush1.msra.mxu0 %v1272
  %1311 = vmatprep.subr.mxu0 0.0
  %1312 = vmatpush2.msra.mxu0 0.0
  %1313 = vmatprep.subr.mxu0 0.0
  %1314 = vmatpush2.msra.mxu0 0.0
  %1315 = vmatprep.subr.mxu0 0.0
  %1316 = vmatpush2.msra.mxu0 0.0
  %1317 = vmatprep.subr.mxu0 0.0
  %1318 = vmatpush2.msra.mxu0 0.0
  %1319 = vmatprep.subr.mxu0 0.0
  %1320 = vmatpush2.msra.mxu0 0.0
  %1321 = vmatprep.subr.mxu0 0.0
  %1322 = vmatpush2.msra.mxu0 0.0
  %1323 = vmatprep.subr.mxu0 0.0
  %1324 = vmatpush2.msra.mxu0 0.0
  %1325 = vmatprep.subr.mxu0 0.0
  %1326 = vmatpush2.msra.mxu0 0.0
  %1327 = vmatprep.subr.mxu0 0.0
  %1328 = vmatpush2.msra.mxu0 0.0
  %1329 = vmatprep.subr.mxu0 0.0
  %1330 = vmatpush2.msra.mxu0 0.0
  %1331 = vmatprep.subr.mxu0 0.0
  %1332 = vmatpush2.msra.mxu0 0.0
  %1333 = vmatprep.subr.mxu0 0.0
  %1334 = vmatpush2.msra.mxu0 0.0
  %1335 = vmatprep.subr.mxu0 0.0
  %1336 = vmatpush2.msra.mxu0 0.0
  %1337 = vmatprep.subr.mxu0 0.0
  %1338 = vmatpush2.msra.mxu0 0.0
  %1339 = vmatprep.subr.mxu0 0.0
  %1340 = vmatpush2.msra.mxu0 0.0
  %1341 = vmatprep.subr.mxu0 0.0
  %1342 = vmatpush2.msra.mxu0 0.0
  %1343 = vmatprep.mubr.f32.mxu0 0.0
  %1344 = vmatmul.mubr.f32.gmra.mxu0 %v1277
  %v1345 = vpop.f32.mrf.mxu0
  %v1346 = vadd.f32 0.0, %v1345
  %v1347 = vpop.f32.mrf.mxu0
  %1348 = vdwg.mxu0
  %v1349 = vadd.f32 %v1270, %v1346
  %v1350 = vld [vmem:[%s4] sm:$0x1]
  %v1352 = vlaneseq
  %v1353 = vshrl.u32 %v1352, 7
  %v1354 = vsub.s32 0, %v1353
  %v1355 = vrot.slane %v1350, %v1354
  %v1357 = vadd.f32 %v1349, %v1355
  %v1358 = vmul.f32 %v1357, 0.5
  %v1359 = vmul.f32 %v1357, 0.70710677
  %v1360 = verf.f32.pop %v1359
  %v1361 = vadd.f32 %v1360, 1.0
  %v1362 = vmul.f32 %v1358, %v1361
  %v1364 = vrot.slane %v1362, 1
  %v1366 = vadd.f32 %v1362, %v1364
  %v1367 = vrot.slane %v1362, 2
  %v1369 = vadd.f32 %v1366, %v1367
  %v1370 = vrot.slane %v1362, 3
  %v1372 = vadd.f32 %v1369, %v1370
  %v1374 = vrot.slane %v1372, 4
  %1375 = vrot.lane.b32.xlu0 %v1374, 64
  %v1376 = vpop.permute.xlu0 %1375
  %vm1378 = vcmask 523264
  %v1379 = vsel %vm1378, %v1372, %v1376
  %v1380 = vmul.f32 %v1379, 0.25
  %1381 = vst [vmem:[%s5] sm:$0x1] %v1380
  // Predicated region
  $region22: #{cnn_forward.1} parent=0 // pred_check
    _
  $region23: #{cnn_forward.1} parent=0 // pred_check_branch
    %1383 = sbr.rel (0) target = $region25
  $region24: #{cnn_forward.1} parent=0 // pred_region
    _
  $region25: #{cnn_forward.1} parent=0 // pred_fallthru
    _
  // Predicated region
  $region26: #{cnn_forward.1} parent=0 // pred_check
    _
  $region27: #{cnn_forward.1} parent=0 // pred_check_branch
    %1385 = sbr.rel (0) target = $region29
  $region28: #{cnn_forward.1} parent=0 // pred_region
    _
  $region29: #{cnn_forward.1} parent=0 // pred_fallthru
    _

</llo_original>
